<compile_context>
chip_gen: v7x
topology: tpu7x:2x2x1
jax: 0.10.0
libtpu: 0.0.40
codegen_flags: <defaults>
</compile_context>

<pallas_src>
import jax
import jax.numpy as jnp
from jax.experimental import pallas as pl
from jax.experimental.pallas import tpu as pltpu


# PyTorch gate order in W_ih / W_hh rows is (i, f, g, o); the kernel uses
# (i, f, o, g) so all sigmoids are one contiguous slice and tanh another.
_GATE_ORDER = (0, 1, 3, 2)


def lstm_kernel(x_ref, wih_ref, whh_ref, b_ref, wfc_ref, out_ref,
                xw_ref, h_ref, c_ref):
    """Grid = (batch_blocks, T_chunks); axis 1 is the serial time axis.

       x_ref:   (T_chunk*B_blk, I)  bf16  time-major rows for this (bb, tc)
       wih_ref: (I, 4H)             bf16  input->gates  (gate order i,f,o,g)
       whh_ref: (H, 4H)             bf16  hidden->gates (gate order i,f,o,g)
       b_ref:   (1, 4H)             f32   b_ih + b_hh
       wfc_ref: (H, O)              f32   final linear weights
       out_ref: (B_blk, O)          f32   fc(h_T)  (fc bias added in wrapper)
       xw_ref:  (T_chunk*B_blk, 4H) f32   scratch: chunk input projection
       h_ref:   (B_blk, H)          f32   persistent hidden state
       c_ref:   (B_blk, H)          f32   persistent cell state
    """
    H = whh_ref.shape[0]
    Bb = h_ref.shape[0]
    Tc = xw_ref.shape[0] // Bb
    tc = pl.program_id(1)

    @pl.when(tc == 0)
    def _():
        h_ref[...] = jnp.zeros_like(h_ref)
        c_ref[...] = jnp.zeros_like(c_ref)

    # ---- Pass 1 (off the serial path): input projection for this whole chunk
    # as one bf16 MXU matmul with f32 accumulation; LSTM bias folded in so the
    # recurrence has no bias add.
    xw_ref[...] = (
        jnp.dot(x_ref[...], wih_ref[...], preferred_element_type=jnp.float32)
        + b_ref[...]
    )

    # ---- Pass 2: serial recurrence over this chunk's timesteps.
    def step(t, carry):
        h, c = carry
        row = pl.multiple_of(t * Bb, Bb)                     # sublane-aligned
        gates = xw_ref[pl.ds(row, Bb), :] + jnp.dot(
            h.astype(jnp.bfloat16), whh_ref[...],
            preferred_element_type=jnp.float32)              # (Bb, 4H), f32
        # Gate order (i, f, o, g): one contiguous sigmoid + one tanh dispatch.
        sig = jax.nn.sigmoid(gates[:, : 3 * H])
        i_g = sig[:, 0 * H:1 * H]
        f_g = sig[:, 1 * H:2 * H]
        o_g = sig[:, 2 * H:3 * H]
        g_g = jnp.tanh(gates[:, 3 * H:])
        c_new = f_g * c + i_g * g_g
        h_new = o_g * jnp.tanh(c_new)
        return (h_new, c_new)

    # Full unroll only when the per-step live set is small; otherwise a modest
    # unroll so the vreg file is not spilled at large H_pad.
    per_step_bytes = Bb * 4 * H * 4
    unroll = True if (Tc <= 16 and per_step_bytes <= 64 * 1024) else 2
    h_T, c_T = jax.lax.fori_loop(0, Tc, step, (h_ref[...], c_ref[...]),
                                 unroll=unroll)
    h_ref[...] = h_T
    c_ref[...] = c_T

    # ---- Final fc on the last hidden state (lane-dense (B_blk, O_pad) store).
    @pl.when(tc == pl.num_programs(1) - 1)
    def _():
        out_ref[...] = jnp.dot(h_T, wfc_ref[...],
                               preferred_element_type=jnp.float32)


def _round_up(x, m):
    return ((x + m - 1) // m) * m


def _pad_gate_matrix(w, in_pad, H, H_pad):
    """w: (4H, in_dim) PyTorch layout, gate order (i,f,g,o).
       Returns (in_pad, 4*H_pad), gates reordered to (i,f,o,g), each gate block
       zero-padded independently so gate k lives at columns [k*H_pad,(k+1)*H_pad)."""
    w_t = jnp.asarray(w).T               # (in_dim, 4H)
    in_dim = w_t.shape[0]
    blocks = []
    for k in _GATE_ORDER:
        blk = w_t[:, k * H:(k + 1) * H]
        blk = jnp.pad(blk, ((0, in_pad - in_dim), (0, H_pad - H)))
        blocks.append(blk)
    return jnp.concatenate(blocks, axis=1)


def _pad_gate_bias(b, H, H_pad):
    blocks = [jnp.pad(b[k * H:(k + 1) * H], (0, H_pad - H)) for k in _GATE_ORDER]
    return jnp.concatenate(blocks).reshape(1, 4 * H_pad)


def _pick_t_chunk(T, B_blk, H_pad, budget_bytes):
    """Largest divisor of T whose f32 chunk projection fits the VMEM budget."""
    per_step = B_blk * 4 * H_pad * 4
    max_chunk = max(1, budget_bytes // per_step)
    best = 1
    for d in range(1, T + 1):
        if T % d == 0 and d <= max_chunk:
            best = d
    return best


def _vmem_limit_bytes():
    """~3/4 of physical VMEM, clamped: ~48 MiB on v7x, ~96 MiB on v5e/v6e."""
    try:
        cap = int(pltpu.get_tpu_info().vmem_capacity_bytes)
        return int(max(32 << 20, min(cap * 3 // 4, 100 << 20)))
    except Exception:
        return 48 << 20   # safe everywhere


def lstm_model_forward(x, params, *, t_chunk_budget_bytes=8 << 20):
    """x: (B, T, I) float32 -> (B, O) float32.  Matches LSTMModel.forward."""
    B, T, I = x.shape
    H = params["w_hh"].shape[1]
    O = params["w_fc"].shape[0]

    B_pad = _round_up(max(B, 8), 8)        # sublane width
    I_pad = _round_up(I, 8)                # Mosaic lane-pads; keep HBM x small
    H_pad = _round_up(max(H, 128), 128)    # lane-aligned gate slices
    O_pad = _round_up(max(O, 128), 128)    # lane-dense output store

    # v7x: split the batch across the two TensorCores when big enough.
    n_bb = 2 if (B_pad >= 16 and B_pad % 16 == 0) else 1
    B_blk = B_pad // n_bb

    T_chunk = _pick_t_chunk(T, B_blk, H_pad, t_chunk_budget_bytes)
    n_tc = T // T_chunk

    # (B, T, I) -> (n_bb, T, B_blk, I_pad) -> flat (n_bb*T*B_blk, I_pad), bf16.
    # Rows within a (bb, tc) block are contiguous and time-major, so each grid
    # step's x block is a single rectangular DMA.
    x_p = jnp.pad(x, ((0, B_pad - B), (0, 0), (0, I_pad - I)))
    x_p = x_p.reshape(n_bb, B_blk, T, I_pad).transpose(0, 2, 1, 3)
    x_flat = x_p.reshape(n_bb * T * B_blk, I_pad).astype(jnp.bfloat16)

    wih = _pad_gate_matrix(params["w_ih"], I_pad, H, H_pad).astype(jnp.bfloat16)
    whh = _pad_gate_matrix(params["w_hh"], H_pad, H, H_pad).astype(jnp.bfloat16)
    b = _pad_gate_bias(params["b_ih"] + params["b_hh"], H, H_pad)        # f32
    wfc = jnp.pad(params["w_fc"].T, ((0, H_pad - H), (0, O_pad - O)))    # f32

    out_pad = pl.pallas_call(
        lstm_kernel,
        out_shape=jax.ShapeDtypeStruct((B_pad, O_pad), jnp.float32),
        grid_spec=pltpu.PrefetchScalarGridSpec(
            num_scalar_prefetch=0,
            grid=(n_bb, n_tc),
            in_specs=[
                pl.BlockSpec((T_chunk * B_blk, I_pad),
                             lambda bb, tc: (bb * n_tc + tc, 0)),
                pl.BlockSpec(wih.shape, lambda bb, tc: (0, 0)),
                pl.BlockSpec(whh.shape, lambda bb, tc: (0, 0)),
                pl.BlockSpec(b.shape, lambda bb, tc: (0, 0)),
                pl.BlockSpec(wfc.shape, lambda bb, tc: (0, 0)),
            ],
            out_specs=pl.BlockSpec((B_blk, O_pad), lambda bb, tc: (bb, 0)),
            scratch_shapes=[
                pltpu.VMEM((T_chunk * B_blk, 4 * H_pad), jnp.float32),  # chunk xW
                pltpu.VMEM((B_blk, H_pad), jnp.float32),                # h
                pltpu.VMEM((B_blk, H_pad), jnp.float32),                # c
            ],
        ),
        compiler_params=pltpu.CompilerParams(
            dimension_semantics=("parallel", "arbitrary"),
            vmem_limit_bytes=_vmem_limit_bytes(),
        ),
    )(x_flat, wih, whh, b, wfc)

    # Un-pad and fold in the fc bias outside the kernel.
    return out_pad[:B, :O] + params["b_fc"]


def lstm_model_reference(x, params):
    """Pure-JAX f32 reference matching PyTorch nn.LSTM semantics (single layer)."""
    B, T, I = x.shape
    H = params["w_hh"].shape[1]
    wih_t = params["w_ih"].T
    whh_t = params["w_hh"].T
    b = params["b_ih"] + params["b_hh"]

    def step(carry, x_t):
        h, c = carry
        gates = x_t @ wih_t + h @ whh_t + b
        i_g = jax.nn.sigmoid(gates[:, 0 * H:1 * H])
        f_g = jax.nn.sigmoid(gates[:, 1 * H:2 * H])
        g_g = jnp.tanh(gates[:, 2 * H:3 * H])
        o_g = jax.nn.sigmoid(gates[:, 3 * H:4 * H])
        c_new = f_g * c + i_g * g_g
        h_new = o_g * jnp.tanh(c_new)
        return (h_new, c_new), None

    h0 = jnp.zeros((B, H), jnp.float32)
    c0 = jnp.zeros((B, H), jnp.float32)
    (h_T, _), _ = jax.lax.scan(step, (h0, c0), jnp.swapaxes(x, 0, 1))
    return h_T @ params["w_fc"].T + params["b_fc"]


def init_params(key, input_size, hidden_size, output_size):
    """PyTorch-style uniform(-1/sqrt(H), 1/sqrt(H)) init, deterministic."""
    ks = jax.random.split(key, 6)
    k_lstm = 1.0 / jnp.sqrt(hidden_size)
    k_fc = 1.0 / jnp.sqrt(hidden_size)
    u = lambda k, shape, s: jax.random.uniform(k, shape, jnp.float32, -s, s)
    return {
        "w_ih": u(ks[0], (4 * hidden_size, input_size), k_lstm),
        "w_hh": u(ks[1], (4 * hidden_size, hidden_size), k_lstm),
        "b_ih": u(ks[2], (4 * hidden_size,), k_lstm),
        "b_hh": u(ks[3], (4 * hidden_size,), k_lstm),
        "w_fc": u(ks[4], (output_size, hidden_size), k_fc),
        "b_fc": u(ks[5], (output_size,), k_fc),
    }


if __name__ == "__main__":
    B, T, I, H, O = 2, 8, 16, 32, 4

    key = jax.random.PRNGKey(0)
    k_x, k_p = jax.random.split(key)
    x = jax.random.normal(k_x, (B, T, I), dtype=jnp.float32)
    params = init_params(k_p, I, H, O)

    out = jax.block_until_ready(lstm_model_forward(x, params))
    ref = jax.block_until_ready(lstm_model_reference(x, params))

    assert out.shape == (B, O)
    # bf16 matmul operands (f32 accumulation) vs. the pure-f32 reference:
    # slightly relaxed tolerance per the review's correctness note.
    assert jnp.allclose(out, ref, atol=5e-3, rtol=5e-3), "mismatch vs JAX reference"

    print("KERNEL_OK")
</pallas_src>

<mosaic_0001>
module attributes {stable_mosaic.version = 11 : i64} {
  func.func @lstm_kernel(%arg0: i32, %arg1: i32, %arg2: memref<64x16xbf16, #tpu.memory_space<vmem>>, %arg3: memref<16x512xbf16, #tpu.memory_space<vmem>>, %arg4: memref<128x512xbf16, #tpu.memory_space<vmem>>, %arg5: memref<1x512xf32, #tpu.memory_space<vmem>>, %arg6: memref<128x128xf32, #tpu.memory_space<vmem>>, %arg7: memref<8x128xf32, #tpu.memory_space<vmem>>, %arg8: memref<64x512xf32, #tpu.memory_space<vmem>>, %arg9: memref<8x128xf32, #tpu.memory_space<vmem>>, %arg10: memref<8x128xf32, #tpu.memory_space<vmem>>) attributes {dimension_semantics = [#tpu.dimension_semantics<parallel>, #tpu.dimension_semantics<arbitrary>], iteration_bounds = array<i64: 1, 1>, scalar_prefetch = 0 : i64, scratch_operands = 3 : i64, tpu.core_type = #tpu.core_type<tc>, window_params = [{transform_indices = @transform_0, window_bounds = array<i64: 64, 16>}, {pipeline_mode = #tpu.pipeline_mode<synchronous>, transform_indices = @transform_1, window_bounds = array<i64: 16, 512>}, {pipeline_mode = #tpu.pipeline_mode<synchronous>, transform_indices = @transform_2, window_bounds = array<i64: 128, 512>}, {pipeline_mode = #tpu.pipeline_mode<synchronous>, transform_indices = @transform_3, window_bounds = array<i64: 1, 512>}, {pipeline_mode = #tpu.pipeline_mode<synchronous>, transform_indices = @transform_4, window_bounds = array<i64: 128, 128>}, {transform_indices = @transform_5, window_bounds = array<i64: 8, 128>}]} {
    %c0_i32 = arith.constant 0 : i32
    %0 = arith.cmpi eq, %arg1, %c0_i32 : i32
    %1 = arith.extui %0 : i1 to i32
    %c0_i32_0 = arith.constant 0 : i32
    %2 = arith.cmpi ne, %1, %c0_i32_0 : i32
    scf.if %2 {
      %cst_67 = arith.constant 0.000000e+00 : f32
      %209 = vector.broadcast %cst_67 : f32 to vector<8x128xf32>
      %c0_68 = arith.constant 0 : index
      %c0_69 = arith.constant 0 : index
      %210 = vector.load %arg9[%c0_68, %c0_69] : memref<8x128xf32, #tpu.memory_space<vmem>>, vector<8x128xf32>
      tpu.vector_store %arg9[%c0_68, %c0_69], %209 {strides = array<i32>} : memref<8x128xf32, #tpu.memory_space<vmem>>, vector<8x128xf32>,
      %cst_70 = arith.constant 0.000000e+00 : f32
      %211 = vector.broadcast %cst_70 : f32 to vector<8x128xf32>
      %c0_71 = arith.constant 0 : index
      %c0_72 = arith.constant 0 : index
      %212 = vector.load %arg10[%c0_71, %c0_72] : memref<8x128xf32, #tpu.memory_space<vmem>>, vector<8x128xf32>
      tpu.vector_store %arg10[%c0_71, %c0_72], %211 {strides = array<i32>} : memref<8x128xf32, #tpu.memory_space<vmem>>, vector<8x128xf32>,
    } else {
    }
    %c0 = arith.constant 0 : index
    %c0_1 = arith.constant 0 : index
    %3 = vector.load %arg2[%c0, %c0_1] : memref<64x16xbf16, #tpu.memory_space<vmem>>, vector<64x16xbf16>
    %c0_2 = arith.constant 0 : index
    %c0_3 = arith.constant 0 : index
    %4 = vector.load %arg3[%c0_2, %c0_3] : memref<16x512xbf16, #tpu.memory_space<vmem>>, vector<16x512xbf16>
    %cst = arith.constant dense<0.000000e+00> : vector<64x512xf32>
    %5 = tpu.matmul %3, %4, %cst {dimension_numbers = #tpu.dot_dimension_numbers<[1], [0], [0], [1], [0, 0, 1, 1], [], []>} : vector<64x16xbf16>, vector<16x512xbf16>, vector<64x512xf32> -> vector<64x512xf32>
    %c0_4 = arith.constant 0 : index
    %c0_5 = arith.constant 0 : index
    %6 = vector.load %arg5[%c0_4, %c0_5] : memref<1x512xf32, #tpu.memory_space<vmem>>, vector<1x512xf32>
    %7 = vector.broadcast %6 : vector<1x512xf32> to vector<64x512xf32>
    %8 = arith.addf %5, %7 : vector<64x512xf32>
    %c0_6 = arith.constant 0 : index
    %c0_7 = arith.constant 0 : index
    %9 = vector.load %arg8[%c0_6, %c0_7] : memref<64x512xf32, #tpu.memory_space<vmem>>, vector<64x512xf32>
    tpu.vector_store %arg8[%c0_6, %c0_7], %8 {strides = array<i32>} : memref<64x512xf32, #tpu.memory_space<vmem>>, vector<64x512xf32>,
    %c0_8 = arith.constant 0 : index
    %c0_9 = arith.constant 0 : index
    %10 = vector.load %arg9[%c0_8, %c0_9] : memref<8x128xf32, #tpu.memory_space<vmem>>, vector<8x128xf32>
    %c0_10 = arith.constant 0 : index
    %c0_11 = arith.constant 0 : index
    %11 = vector.load %arg10[%c0_10, %c0_11] : memref<8x128xf32, #tpu.memory_space<vmem>>, vector<8x128xf32>
    %c0_i32_12 = arith.constant 0 : i32
    %c8_i32 = arith.constant 8 : i32
    %12 = arith.muli %c0_i32_12, %c8_i32 : i32
    %13 = tpu.assume_multiple %12, 8 : i32
    %14 = arith.index_cast %13 : i32 to index
    %c0_13 = arith.constant 0 : index
    %15 = vector.load %arg8[%14, %c0_13] : memref<64x512xf32, #tpu.memory_space<vmem>>, vector<8x512xf32>
    %16 = arith.truncf %10 : vector<8x128xf32> to vector<8x128xbf16>
    %c0_14 = arith.constant 0 : index
    %c0_15 = arith.constant 0 : index
    %17 = vector.load %arg4[%c0_14, %c0_15] : memref<128x512xbf16, #tpu.memory_space<vmem>>, vector<128x512xbf16>
    %cst_16 = arith.constant dense<0.000000e+00> : vector<8x512xf32>
    %18 = tpu.matmul %16, %17, %cst_16 {dimension_numbers = #tpu.dot_dimension_numbers<[1], [0], [0], [1], [0, 0, 1, 1], [], []>} : vector<8x128xbf16>, vector<128x512xbf16>, vector<8x512xf32> -> vector<8x512xf32>
    %19 = arith.addf %15, %18 : vector<8x512xf32>
    %20 = vector.extract_strided_slice %19 {offsets = [0, 0], sizes = [8, 384], strides = [1, 1]} : vector<8x512xf32> to vector<8x384xf32>
    %21 = arith.negf %20 : vector<8x384xf32>
    %22 = math.exp %21 : vector<8x384xf32>
    %cst_17 = arith.constant 1.000000e+00 : f32
    %23 = vector.broadcast %cst_17 : f32 to vector<8x384xf32>
    %24 = arith.addf %23, %22 : vector<8x384xf32>
    %25 = arith.divf %23, %24 : vector<8x384xf32>
    %26 = vector.extract_strided_slice %25 {offsets = [0, 0], sizes = [8, 128], strides = [1, 1]} : vector<8x384xf32> to vector<8x128xf32>
    %27 = vector.extract_strided_slice %25 {offsets = [0, 128], sizes = [8, 128], strides = [1, 1]} : vector<8x384xf32> to vector<8x128xf32>
    %28 = vector.extract_strided_slice %25 {offsets = [0, 256], sizes = [8, 128], strides = [1, 1]} : vector<8x384xf32> to vector<8x128xf32>
    %29 = vector.extract_strided_slice %19 {offsets = [0, 384], sizes = [8, 128], strides = [1, 1]} : vector<8x512xf32> to vector<8x128xf32>
    %30 = math.tanh %29 : vector<8x128xf32>
    %31 = arith.mulf %27, %11 : vector<8x128xf32>
    %32 = arith.mulf %26, %30 : vector<8x128xf32>
    %33 = arith.addf %31, %32 : vector<8x128xf32>
    %34 = math.tanh %33 : vector<8x128xf32>
    %35 = arith.mulf %28, %34 : vector<8x128xf32>
    %c1_i32 = arith.constant 1 : i32
    %c8_i32_18 = arith.constant 8 : i32
    %36 = arith.muli %c1_i32, %c8_i32_18 : i32
    %37 = tpu.assume_multiple %36, 8 : i32
    %38 = arith.index_cast %37 : i32 to index
    %c0_19 = arith.constant 0 : index
    %39 = vector.load %arg8[%38, %c0_19] : memref<64x512xf32, #tpu.memory_space<vmem>>, vector<8x512xf32>
    %40 = arith.truncf %35 : vector<8x128xf32> to vector<8x128xbf16>
    %c0_20 = arith.constant 0 : index
    %c0_21 = arith.constant 0 : index
    %41 = vector.load %arg4[%c0_20, %c0_21] : memref<128x512xbf16, #tpu.memory_space<vmem>>, vector<128x512xbf16>
    %cst_22 = arith.constant dense<0.000000e+00> : vector<8x512xf32>
    %42 = tpu.matmul %40, %41, %cst_22 {dimension_numbers = #tpu.dot_dimension_numbers<[1], [0], [0], [1], [0, 0, 1, 1], [], []>} : vector<8x128xbf16>, vector<128x512xbf16>, vector<8x512xf32> -> vector<8x512xf32>
    %43 = arith.addf %39, %42 : vector<8x512xf32>
    %44 = vector.extract_strided_slice %43 {offsets = [0, 0], sizes = [8, 384], strides = [1, 1]} : vector<8x512xf32> to vector<8x384xf32>
    %45 = arith.negf %44 : vector<8x384xf32>
    %46 = math.exp %45 : vector<8x384xf32>
    %cst_23 = arith.constant 1.000000e+00 : f32
    %47 = vector.broadcast %cst_23 : f32 to vector<8x384xf32>
    %48 = arith.addf %47, %46 : vector<8x384xf32>
    %49 = arith.divf %47, %48 : vector<8x384xf32>
    %50 = vector.extract_strided_slice %49 {offsets = [0, 0], sizes = [8, 128], strides = [1, 1]} : vector<8x384xf32> to vector<8x128xf32>
    %51 = vector.extract_strided_slice %49 {offsets = [0, 128], sizes = [8, 128], strides = [1, 1]} : vector<8x384xf32> to vector<8x128xf32>
    %52 = vector.extract_strided_slice %49 {offsets = [0, 256], sizes = [8, 128], strides = [1, 1]} : vector<8x384xf32> to vector<8x128xf32>
    %53 = vector.extract_strided_slice %43 {offsets = [0, 384], sizes = [8, 128], strides = [1, 1]} : vector<8x512xf32> to vector<8x128xf32>
    %54 = math.tanh %53 : vector<8x128xf32>
    %55 = arith.mulf %51, %33 : vector<8x128xf32>
    %56 = arith.mulf %50, %54 : vector<8x128xf32>
    %57 = arith.addf %55, %56 : vector<8x128xf32>
    %58 = math.tanh %57 : vector<8x128xf32>
    %59 = arith.mulf %52, %58 : vector<8x128xf32>
    %c2_i32 = arith.constant 2 : i32
    %c8_i32_24 = arith.constant 8 : i32
    %60 = arith.muli %c2_i32, %c8_i32_24 : i32
    %61 = tpu.assume_multiple %60, 8 : i32
    %62 = arith.index_cast %61 : i32 to index
    %c0_25 = arith.constant 0 : index
    %63 = vector.load %arg8[%62, %c0_25] : memref<64x512xf32, #tpu.memory_space<vmem>>, vector<8x512xf32>
    %64 = arith.truncf %59 : vector<8x128xf32> to vector<8x128xbf16>
    %c0_26 = arith.constant 0 : index
    %c0_27 = arith.constant 0 : index
    %65 = vector.load %arg4[%c0_26, %c0_27] : memref<128x512xbf16, #tpu.memory_space<vmem>>, vector<128x512xbf16>
    %cst_28 = arith.constant dense<0.000000e+00> : vector<8x512xf32>
    %66 = tpu.matmul %64, %65, %cst_28 {dimension_numbers = #tpu.dot_dimension_numbers<[1], [0], [0], [1], [0, 0, 1, 1], [], []>} : vector<8x128xbf16>, vector<128x512xbf16>, vector<8x512xf32> -> vector<8x512xf32>
    %67 = arith.addf %63, %66 : vector<8x512xf32>
    %68 = vector.extract_strided_slice %67 {offsets = [0, 0], sizes = [8, 384], strides = [1, 1]} : vector<8x512xf32> to vector<8x384xf32>
    %69 = arith.negf %68 : vector<8x384xf32>
    %70 = math.exp %69 : vector<8x384xf32>
    %cst_29 = arith.constant 1.000000e+00 : f32
    %71 = vector.broadcast %cst_29 : f32 to vector<8x384xf32>
    %72 = arith.addf %71, %70 : vector<8x384xf32>
    %73 = arith.divf %71, %72 : vector<8x384xf32>
    %74 = vector.extract_strided_slice %73 {offsets = [0, 0], sizes = [8, 128], strides = [1, 1]} : vector<8x384xf32> to vector<8x128xf32>
    %75 = vector.extract_strided_slice %73 {offsets = [0, 128], sizes = [8, 128], strides = [1, 1]} : vector<8x384xf32> to vector<8x128xf32>
    %76 = vector.extract_strided_slice %73 {offsets = [0, 256], sizes = [8, 128], strides = [1, 1]} : vector<8x384xf32> to vector<8x128xf32>
    %77 = vector.extract_strided_slice %67 {offsets = [0, 384], sizes = [8, 128], strides = [1, 1]} : vector<8x512xf32> to vector<8x128xf32>
    %78 = math.tanh %77 : vector<8x128xf32>
    %79 = arith.mulf %75, %57 : vector<8x128xf32>
    %80 = arith.mulf %74, %78 : vector<8x128xf32>
    %81 = arith.addf %79, %80 : vector<8x128xf32>
    %82 = math.tanh %81 : vector<8x128xf32>
    %83 = arith.mulf %76, %82 : vector<8x128xf32>
    %c3_i32 = arith.constant 3 : i32
    %c8_i32_30 = arith.constant 8 : i32
    %84 = arith.muli %c3_i32, %c8_i32_30 : i32
    %85 = tpu.assume_multiple %84, 8 : i32
    %86 = arith.index_cast %85 : i32 to index
    %c0_31 = arith.constant 0 : index
    %87 = vector.load %arg8[%86, %c0_31] : memref<64x512xf32, #tpu.memory_space<vmem>>, vector<8x512xf32>
    %88 = arith.truncf %83 : vector<8x128xf32> to vector<8x128xbf16>
    %c0_32 = arith.constant 0 : index
    %c0_33 = arith.constant 0 : index
    %89 = vector.load %arg4[%c0_32, %c0_33] : memref<128x512xbf16, #tpu.memory_space<vmem>>, vector<128x512xbf16>
    %cst_34 = arith.constant dense<0.000000e+00> : vector<8x512xf32>
    %90 = tpu.matmul %88, %89, %cst_34 {dimension_numbers = #tpu.dot_dimension_numbers<[1], [0], [0], [1], [0, 0, 1, 1], [], []>} : vector<8x128xbf16>, vector<128x512xbf16>, vector<8x512xf32> -> vector<8x512xf32>
    %91 = arith.addf %87, %90 : vector<8x512xf32>
    %92 = vector.extract_strided_slice %91 {offsets = [0, 0], sizes = [8, 384], strides = [1, 1]} : vector<8x512xf32> to vector<8x384xf32>
    %93 = arith.negf %92 : vector<8x384xf32>
    %94 = math.exp %93 : vector<8x384xf32>
    %cst_35 = arith.constant 1.000000e+00 : f32
    %95 = vector.broadcast %cst_35 : f32 to vector<8x384xf32>
    %96 = arith.addf %95, %94 : vector<8x384xf32>
    %97 = arith.divf %95, %96 : vector<8x384xf32>
    %98 = vector.extract_strided_slice %97 {offsets = [0, 0], sizes = [8, 128], strides = [1, 1]} : vector<8x384xf32> to vector<8x128xf32>
    %99 = vector.extract_strided_slice %97 {offsets = [0, 128], sizes = [8, 128], strides = [1, 1]} : vector<8x384xf32> to vector<8x128xf32>
    %100 = vector.extract_strided_slice %97 {offsets = [0, 256], sizes = [8, 128], strides = [1, 1]} : vector<8x384xf32> to vector<8x128xf32>
    %101 = vector.extract_strided_slice %91 {offsets = [0, 384], sizes = [8, 128], strides = [1, 1]} : vector<8x512xf32> to vector<8x128xf32>
    %102 = math.tanh %101 : vector<8x128xf32>
    %103 = arith.mulf %99, %81 : vector<8x128xf32>
    %104 = arith.mulf %98, %102 : vector<8x128xf32>
    %105 = arith.addf %103, %104 : vector<8x128xf32>
    %106 = math.tanh %105 : vector<8x128xf32>
    %107 = arith.mulf %100, %106 : vector<8x128xf32>
    %c4_i32 = arith.constant 4 : i32
    %c8_i32_36 = arith.constant 8 : i32
    %108 = arith.muli %c4_i32, %c8_i32_36 : i32
    %109 = tpu.assume_multiple %108, 8 : i32
    %110 = arith.index_cast %109 : i32 to index
    %c0_37 = arith.constant 0 : index
    %111 = vector.load %arg8[%110, %c0_37] : memref<64x512xf32, #tpu.memory_space<vmem>>, vector<8x512xf32>
    %112 = arith.truncf %107 : vector<8x128xf32> to vector<8x128xbf16>
    %c0_38 = arith.constant 0 : index
    %c0_39 = arith.constant 0 : index
    %113 = vector.load %arg4[%c0_38, %c0_39] : memref<128x512xbf16, #tpu.memory_space<vmem>>, vector<128x512xbf16>
    %cst_40 = arith.constant dense<0.000000e+00> : vector<8x512xf32>
    %114 = tpu.matmul %112, %113, %cst_40 {dimension_numbers = #tpu.dot_dimension_numbers<[1], [0], [0], [1], [0, 0, 1, 1], [], []>} : vector<8x128xbf16>, vector<128x512xbf16>, vector<8x512xf32> -> vector<8x512xf32>
    %115 = arith.addf %111, %114 : vector<8x512xf32>
    %116 = vector.extract_strided_slice %115 {offsets = [0, 0], sizes = [8, 384], strides = [1, 1]} : vector<8x512xf32> to vector<8x384xf32>
    %117 = arith.negf %116 : vector<8x384xf32>
    %118 = math.exp %117 : vector<8x384xf32>
    %cst_41 = arith.constant 1.000000e+00 : f32
    %119 = vector.broadcast %cst_41 : f32 to vector<8x384xf32>
    %120 = arith.addf %119, %118 : vector<8x384xf32>
    %121 = arith.divf %119, %120 : vector<8x384xf32>
    %122 = vector.extract_strided_slice %121 {offsets = [0, 0], sizes = [8, 128], strides = [1, 1]} : vector<8x384xf32> to vector<8x128xf32>
    %123 = vector.extract_strided_slice %121 {offsets = [0, 128], sizes = [8, 128], strides = [1, 1]} : vector<8x384xf32> to vector<8x128xf32>
    %124 = vector.extract_strided_slice %121 {offsets = [0, 256], sizes = [8, 128], strides = [1, 1]} : vector<8x384xf32> to vector<8x128xf32>
    %125 = vector.extract_strided_slice %115 {offsets = [0, 384], sizes = [8, 128], strides = [1, 1]} : vector<8x512xf32> to vector<8x128xf32>
    %126 = math.tanh %125 : vector<8x128xf32>
    %127 = arith.mulf %123, %105 : vector<8x128xf32>
    %128 = arith.mulf %122, %126 : vector<8x128xf32>
    %129 = arith.addf %127, %128 : vector<8x128xf32>
    %130 = math.tanh %129 : vector<8x128xf32>
    %131 = arith.mulf %124, %130 : vector<8x128xf32>
    %c5_i32 = arith.constant 5 : i32
    %c8_i32_42 = arith.constant 8 : i32
    %132 = arith.muli %c5_i32, %c8_i32_42 : i32
    %133 = tpu.assume_multiple %132, 8 : i32
    %134 = arith.index_cast %133 : i32 to index
    %c0_43 = arith.constant 0 : index
    %135 = vector.load %arg8[%134, %c0_43] : memref<64x512xf32, #tpu.memory_space<vmem>>, vector<8x512xf32>
    %136 = arith.truncf %131 : vector<8x128xf32> to vector<8x128xbf16>
    %c0_44 = arith.constant 0 : index
    %c0_45 = arith.constant 0 : index
    %137 = vector.load %arg4[%c0_44, %c0_45] : memref<128x512xbf16, #tpu.memory_space<vmem>>, vector<128x512xbf16>
    %cst_46 = arith.constant dense<0.000000e+00> : vector<8x512xf32>
    %138 = tpu.matmul %136, %137, %cst_46 {dimension_numbers = #tpu.dot_dimension_numbers<[1], [0], [0], [1], [0, 0, 1, 1], [], []>} : vector<8x128xbf16>, vector<128x512xbf16>, vector<8x512xf32> -> vector<8x512xf32>
    %139 = arith.addf %135, %138 : vector<8x512xf32>
    %140 = vector.extract_strided_slice %139 {offsets = [0, 0], sizes = [8, 384], strides = [1, 1]} : vector<8x512xf32> to vector<8x384xf32>
    %141 = arith.negf %140 : vector<8x384xf32>
    %142 = math.exp %141 : vector<8x384xf32>
    %cst_47 = arith.constant 1.000000e+00 : f32
    %143 = vector.broadcast %cst_47 : f32 to vector<8x384xf32>
    %144 = arith.addf %143, %142 : vector<8x384xf32>
    %145 = arith.divf %143, %144 : vector<8x384xf32>
    %146 = vector.extract_strided_slice %145 {offsets = [0, 0], sizes = [8, 128], strides = [1, 1]} : vector<8x384xf32> to vector<8x128xf32>
    %147 = vector.extract_strided_slice %145 {offsets = [0, 128], sizes = [8, 128], strides = [1, 1]} : vector<8x384xf32> to vector<8x128xf32>
    %148 = vector.extract_strided_slice %145 {offsets = [0, 256], sizes = [8, 128], strides = [1, 1]} : vector<8x384xf32> to vector<8x128xf32>
    %149 = vector.extract_strided_slice %139 {offsets = [0, 384], sizes = [8, 128], strides = [1, 1]} : vector<8x512xf32> to vector<8x128xf32>
    %150 = math.tanh %149 : vector<8x128xf32>
    %151 = arith.mulf %147, %129 : vector<8x128xf32>
    %152 = arith.mulf %146, %150 : vector<8x128xf32>
    %153 = arith.addf %151, %152 : vector<8x128xf32>
    %154 = math.tanh %153 : vector<8x128xf32>
    %155 = arith.mulf %148, %154 : vector<8x128xf32>
    %c6_i32 = arith.constant 6 : i32
    %c8_i32_48 = arith.constant 8 : i32
    %156 = arith.muli %c6_i32, %c8_i32_48 : i32
    %157 = tpu.assume_multiple %156, 8 : i32
    %158 = arith.index_cast %157 : i32 to index
    %c0_49 = arith.constant 0 : index
    %159 = vector.load %arg8[%158, %c0_49] : memref<64x512xf32, #tpu.memory_space<vmem>>, vector<8x512xf32>
    %160 = arith.truncf %155 : vector<8x128xf32> to vector<8x128xbf16>
    %c0_50 = arith.constant 0 : index
    %c0_51 = arith.constant 0 : index
    %161 = vector.load %arg4[%c0_50, %c0_51] : memref<128x512xbf16, #tpu.memory_space<vmem>>, vector<128x512xbf16>
    %cst_52 = arith.constant dense<0.000000e+00> : vector<8x512xf32>
    %162 = tpu.matmul %160, %161, %cst_52 {dimension_numbers = #tpu.dot_dimension_numbers<[1], [0], [0], [1], [0, 0, 1, 1], [], []>} : vector<8x128xbf16>, vector<128x512xbf16>, vector<8x512xf32> -> vector<8x512xf32>
    %163 = arith.addf %159, %162 : vector<8x512xf32>
    %164 = vector.extract_strided_slice %163 {offsets = [0, 0], sizes = [8, 384], strides = [1, 1]} : vector<8x512xf32> to vector<8x384xf32>
    %165 = arith.negf %164 : vector<8x384xf32>
    %166 = math.exp %165 : vector<8x384xf32>
    %cst_53 = arith.constant 1.000000e+00 : f32
    %167 = vector.broadcast %cst_53 : f32 to vector<8x384xf32>
    %168 = arith.addf %167, %166 : vector<8x384xf32>
    %169 = arith.divf %167, %168 : vector<8x384xf32>
    %170 = vector.extract_strided_slice %169 {offsets = [0, 0], sizes = [8, 128], strides = [1, 1]} : vector<8x384xf32> to vector<8x128xf32>
    %171 = vector.extract_strided_slice %169 {offsets = [0, 128], sizes = [8, 128], strides = [1, 1]} : vector<8x384xf32> to vector<8x128xf32>
    %172 = vector.extract_strided_slice %169 {offsets = [0, 256], sizes = [8, 128], strides = [1, 1]} : vector<8x384xf32> to vector<8x128xf32>
    %173 = vector.extract_strided_slice %163 {offsets = [0, 384], sizes = [8, 128], strides = [1, 1]} : vector<8x512xf32> to vector<8x128xf32>
    %174 = math.tanh %173 : vector<8x128xf32>
    %175 = arith.mulf %171, %153 : vector<8x128xf32>
    %176 = arith.mulf %170, %174 : vector<8x128xf32>
    %177 = arith.addf %175, %176 : vector<8x128xf32>
    %178 = math.tanh %177 : vector<8x128xf32>
    %179 = arith.mulf %172, %178 : vector<8x128xf32>
    %c7_i32 = arith.constant 7 : i32
    %c8_i32_54 = arith.constant 8 : i32
    %180 = arith.muli %c7_i32, %c8_i32_54 : i32
    %181 = tpu.assume_multiple %180, 8 : i32
    %182 = arith.index_cast %181 : i32 to index
    %c0_55 = arith.constant 0 : index
    %183 = vector.load %arg8[%182, %c0_55] : memref<64x512xf32, #tpu.memory_space<vmem>>, vector<8x512xf32>
    %184 = arith.truncf %179 : vector<8x128xf32> to vector<8x128xbf16>
    %c0_56 = arith.constant 0 : index
    %c0_57 = arith.constant 0 : index
    %185 = vector.load %arg4[%c0_56, %c0_57] : memref<128x512xbf16, #tpu.memory_space<vmem>>, vector<128x512xbf16>
    %cst_58 = arith.constant dense<0.000000e+00> : vector<8x512xf32>
    %186 = tpu.matmul %184, %185, %cst_58 {dimension_numbers = #tpu.dot_dimension_numbers<[1], [0], [0], [1], [0, 0, 1, 1], [], []>} : vector<8x128xbf16>, vector<128x512xbf16>, vector<8x512xf32> -> vector<8x512xf32>
    %187 = arith.addf %183, %186 : vector<8x512xf32>
    %188 = vector.extract_strided_slice %187 {offsets = [0, 0], sizes = [8, 384], strides = [1, 1]} : vector<8x512xf32> to vector<8x384xf32>
    %189 = arith.negf %188 : vector<8x384xf32>
    %190 = math.exp %189 : vector<8x384xf32>
    %cst_59 = arith.constant 1.000000e+00 : f32
    %191 = vector.broadcast %cst_59 : f32 to vector<8x384xf32>
    %192 = arith.addf %191, %190 : vector<8x384xf32>
    %193 = arith.divf %191, %192 : vector<8x384xf32>
    %194 = vector.extract_strided_slice %193 {offsets = [0, 0], sizes = [8, 128], strides = [1, 1]} : vector<8x384xf32> to vector<8x128xf32>
    %195 = vector.extract_strided_slice %193 {offsets = [0, 128], sizes = [8, 128], strides = [1, 1]} : vector<8x384xf32> to vector<8x128xf32>
    %196 = vector.extract_strided_slice %193 {offsets = [0, 256], sizes = [8, 128], strides = [1, 1]} : vector<8x384xf32> to vector<8x128xf32>
    %197 = vector.extract_strided_slice %187 {offsets = [0, 384], sizes = [8, 128], strides = [1, 1]} : vector<8x512xf32> to vector<8x128xf32>
    %198 = math.tanh %197 : vector<8x128xf32>
    %199 = arith.mulf %195, %177 : vector<8x128xf32>
    %200 = arith.mulf %194, %198 : vector<8x128xf32>
    %201 = arith.addf %199, %200 : vector<8x128xf32>
    %202 = math.tanh %201 : vector<8x128xf32>
    %203 = arith.mulf %196, %202 : vector<8x128xf32>
    %c8_i32_60 = arith.constant 8 : i32
    %c0_61 = arith.constant 0 : index
    %c0_62 = arith.constant 0 : index
    %204 = vector.load %arg9[%c0_61, %c0_62] : memref<8x128xf32, #tpu.memory_space<vmem>>, vector<8x128xf32>
    tpu.vector_store %arg9[%c0_61, %c0_62], %203 {strides = array<i32>} : memref<8x128xf32, #tpu.memory_space<vmem>>, vector<8x128xf32>,
    %c0_63 = arith.constant 0 : index
    %c0_64 = arith.constant 0 : index
    %205 = vector.load %arg10[%c0_63, %c0_64] : memref<8x128xf32, #tpu.memory_space<vmem>>, vector<8x128xf32>
    tpu.vector_store %arg10[%c0_63, %c0_64], %201 {strides = array<i32>} : memref<8x128xf32, #tpu.memory_space<vmem>>, vector<8x128xf32>,
    %c0_i32_65 = arith.constant 0 : i32
    %206 = arith.cmpi eq, %arg1, %c0_i32_65 : i32
    %207 = arith.extui %206 : i1 to i32
    %c0_i32_66 = arith.constant 0 : i32
    %208 = arith.cmpi ne, %207, %c0_i32_66 : i32
    scf.if %208 {
      %c0_67 = arith.constant 0 : index
      %c0_68 = arith.constant 0 : index
      %209 = vector.load %arg6[%c0_67, %c0_68] : memref<128x128xf32, #tpu.memory_space<vmem>>, vector<128x128xf32>
      %cst_69 = arith.constant dense<0.000000e+00> : vector<8x128xf32>
      %210 = tpu.matmul %203, %209, %cst_69 {dimension_numbers = #tpu.dot_dimension_numbers<[1], [0], [0], [1], [0, 0, 1, 1], [], []>} : vector<8x128xf32>, vector<128x128xf32>, vector<8x128xf32> -> vector<8x128xf32>
      %c0_70 = arith.constant 0 : index
      %c0_71 = arith.constant 0 : index
      %211 = vector.load %arg7[%c0_70, %c0_71] : memref<8x128xf32, #tpu.memory_space<vmem>>, vector<8x128xf32>
      tpu.vector_store %arg7[%c0_70, %c0_71], %210 {strides = array<i32>} : memref<8x128xf32, #tpu.memory_space<vmem>>, vector<8x128xf32>,
    } else {
    }
    return
  }
  func.func @transform_0(%arg0: i32, %arg1: i32) -> (i32, i32) {
    %c1_i32 = arith.constant 1 : i32
    %0 = arith.muli %arg0, %c1_i32 : i32
    %1 = arith.addi %0, %arg1 : i32
    %c0_i32 = arith.constant 0 : i32
    %c0_i32_0 = arith.constant 0 : i32
    return %1, %c0_i32 : i32, i32
  }
  func.func @transform_1(%arg0: i32, %arg1: i32) -> (i32, i32) {
    %c0_i32 = arith.constant 0 : i32
    %c0_i32_0 = arith.constant 0 : i32
    %c0_i32_1 = arith.constant 0 : i32
    return %c0_i32, %c0_i32_0 : i32, i32
  }
  func.func @transform_2(%arg0: i32, %arg1: i32) -> (i32, i32) {
    %c0_i32 = arith.constant 0 : i32
    %c0_i32_0 = arith.constant 0 : i32
    %c0_i32_1 = arith.constant 0 : i32
    return %c0_i32, %c0_i32_0 : i32, i32
  }
  func.func @transform_3(%arg0: i32, %arg1: i32) -> (i32, i32) {
    %c0_i32 = arith.constant 0 : i32
    %c0_i32_0 = arith.constant 0 : i32
    %c0_i32_1 = arith.constant 0 : i32
    return %c0_i32, %c0_i32_0 : i32, i32
  }
  func.func @transform_4(%arg0: i32, %arg1: i32) -> (i32, i32) {
    %c0_i32 = arith.constant 0 : i32
    %c0_i32_0 = arith.constant 0 : i32
    %c0_i32_1 = arith.constant 0 : i32
    return %c0_i32, %c0_i32_0 : i32, i32
  }
  func.func @transform_5(%arg0: i32, %arg1: i32) -> (i32, i32) {
    %c0_i32 = arith.constant 0 : i32
    %c0_i32_0 = arith.constant 0 : i32
    return %arg0, %c0_i32 : i32, i32
  }
}

</mosaic_0001>

<llo_original>
// kernel: tpu_custom_call.1
$region0: #{tpu_custom_call.1}
  #allocation0 [shape = 'u32[]', space=smem, size = 0x4, offset = 0x4, fixed_abs, tag = 'smem constant byte address 0x4 - core index']
  #allocation1 [shape = 'u32[144,128]{1,0:T(1,128)}', space=vmem, size = 0x12000, scoped, tag = 'internal scratch']
  #allocation2 [shape = 'f32[64,512]{1,0:T(8,128)}', space=vmem, size = 0x20000, scoped, tag = 'scratch operand']
  #allocation3 [shape = 'f32[8,128]{1,0:T(8,128)}', space=vmem, size = 0x1000, scoped, tag = 'scratch operand']
  #allocation4 [shape = 'f32[8,128]{1,0:T(8,128)}', space=vmem, size = 0x1000, scoped, tag = 'scratch operand']
  %s0 = inlined_call_operand.vmem [shape: bf16[64,16], index: 0, kind: input, shape index: {}]
  %s1 = inlined_call_operand.vmem [shape: bf16[16,512], index: 1, kind: input, shape index: {}]
  %s2 = inlined_call_operand.hbm [shape: bf16[128,512], index: 2, kind: input, shape index: {}]
  %s3 = inlined_call_operand.vmem [shape: f32[1,512], index: 3, kind: input, shape index: {}]
  %s4 = inlined_call_operand.hbm [shape: f32[128,128], index: 4, kind: input, shape index: {}]
  %s5 = inlined_call_operand.hbm [shape: f32[8,128], index: 5, kind: output, shape index: {}]
  %s6 = sld [smem:[#allocation0]]
  $region46: #{tpu_custom_call.1} parent=0
    _
  %s8 = ssub.s32 1, %s6
  %s9 = scalar_select 0, %s8, %s6
  $region1: #{tpu_custom_call.1} parent=0
    #allocation5 [shape = 'u8[131072]{0}', space=vmem, size = 0x20000, scoped, tag = 'input window, operand 2, single buffered']
    #allocation6 [shape = 's32[1]{0}', space=sflag, size = 0x4, scoped, tag = 'scoped memory for tpu_custom_call.1']
    #allocation7 [shape = 's32[1]{0}', space=sflag, size = 0x4, scoped, tag = 'scoped memory for tpu_custom_call.1']
    #allocation8 [shape = 'u8[65536]{0}', space=vmem, size = 0x10000, scoped, tag = 'input window, operand 4, single buffered']
    #allocation9 [shape = 's32[1]{0}', space=sflag, size = 0x4, scoped, tag = 'scoped memory for tpu_custom_call.1']
    #allocation10 [shape = 'u8[4096]{0}', space=vmem, size = 0x1000, scoped, tag = 'output window, operand 0, single buffered']
    %10 = vsyncpa [#allocation6], 0
    %11 = vsyncpa [#allocation9], 0
    %12 = vsyncpa [#allocation7], 0
    // Predicated region
    $region2: #{tpu_custom_call.1} parent=1 // pred_check
      _
    $region3: #{tpu_custom_call.1} parent=1 // pred_check_branch
      %14 = sbr.rel (0) target = $region5
    $region4: #{tpu_custom_call.1} parent=1 // pred_region
      %s15 = sadd.s32 0, 0
      %s16 = smul.u32 8, %s15
      %p17 = scmp.lt.s32.totalorder %s16, 7
      %s18 = scalar_select %p17, %s16, 7
      %s19 = smul.addr %s18, 4
      %s20 = scalar_lea.vmem %s0, %s19
      %s21 = sadd.s32 0, 0
      %s22 = smul.u32 8, %s21
    $region5: #{tpu_custom_call.1} parent=1 // pred_fallthru
      _
    // Predicated region
    $region6: #{tpu_custom_call.1} parent=1 // pred_check
      _
    $region7: #{tpu_custom_call.1} parent=1 // pred_check_branch
      %24 = sbr.rel (0) target = $region9
    $region8: #{tpu_custom_call.1} parent=1 // pred_region
      _
    $region9: #{tpu_custom_call.1} parent=1 // pred_fallthru
      _
    // Predicated region
    $region10: #{tpu_custom_call.1} parent=1 // pred_check
      _
    $region11: #{tpu_custom_call.1} parent=1 // pred_check_branch
      %26 = sbr.rel (0) target = $region13
    $region12: #{tpu_custom_call.1} parent=1 // pred_region
      %s28 = ssub.s32 4096, 4096
      %29 = vsyncadd [#allocation6], %s28
      %s30 = sshll.u32 [#allocation5], 4
      %s31 = int_to_ptr.vmem [resolvable:$true] %s30
      %36 = dma.hbm_to_vmem [thread:$0]  %s2, 4096, %s31, [#allocation6], 256, 256, 16
    $region13: #{tpu_custom_call.1} parent=1 // pred_fallthru
      _
    // Predicated region
    $region14: #{tpu_custom_call.1} parent=1 // pred_check
      _
    $region15: #{tpu_custom_call.1} parent=1 // pred_check_branch
      %38 = sbr.rel (0) target = $region17
    $region16: #{tpu_custom_call.1} parent=1 // pred_region
      _
    $region17: #{tpu_custom_call.1} parent=1 // pred_fallthru
      _
    // Predicated region
    $region18: #{tpu_custom_call.1} parent=1 // pred_check
      _
    $region19: #{tpu_custom_call.1} parent=1 // pred_check_branch
      %40 = sbr.rel (0) target = $region21
    $region20: #{tpu_custom_call.1} parent=1 // pred_region
      %s42 = ssub.s32 2048, 2048
      %43 = vsyncadd [#allocation9], %s42
      %s44 = sshll.u32 [#allocation8], 4
      %s45 = int_to_ptr.vmem [resolvable:$true] %s44
      %50 = dma.hbm_to_vmem [thread:$0]  %s4, 2048, %s45, [#allocation9], 128, 128, 8
    $region21: #{tpu_custom_call.1} parent=1 // pred_fallthru
      _
    // Predicated region
    $region22: #{tpu_custom_call.1} parent=1 // pred_check
      _
    $region23: #{tpu_custom_call.1} parent=1 // pred_check_branch
      %52 = sbr.rel (0) target = $region25
    $region24: #{tpu_custom_call.1} parent=1 // pred_region
      %53 = dma.done [#allocation6], 4096
    $region25: #{tpu_custom_call.1} parent=1 // pred_fallthru
      _
    // Predicated region
    $region26: #{tpu_custom_call.1} parent=1 // pred_check
      _
    $region27: #{tpu_custom_call.1} parent=1 // pred_check_branch
      %55 = sbr.rel (0) target = $region29
    $region28: #{tpu_custom_call.1} parent=1 // pred_region
      %56 = dma.done [#allocation9], 2048
    $region29: #{tpu_custom_call.1} parent=1 // pred_fallthru
      _
    %s57 = sadd.s32 0, 0
    %s58 = smul.u32 8, %s57
    %p59 = scmp.lt.s32.totalorder %s58, 7
    %s60 = scalar_select %p59, %s58, 7
    %s61 = smul.addr %s60, 4
    %s62 = scalar_lea.vmem %s0, %s61
    %s63 = sadd.s32 0, 0
    %s64 = smul.u32 8, %s63
    %p65 = scmp.lt.s32.totalorder %s64, 7
    %s66 = scalar_select %p65, %s64, 7
    %s67 = smul.addr %s66, 4
    %s68 = scalar_lea.vmem %s0, %s67
    %s69 = sadd.s32 0, 0
    %s70 = smul.u32 8, %s69
    %p72 = scmp.eq.s32.totalorder 0, 0
    // Predicated region
    $region30: #{tpu_custom_call.1} parent=1 // pred_check
      %p73 = pneg %p72
    $region31: #{tpu_custom_call.1} parent=1 // pred_check_branch
      %75 = sbr.rel (%p73) target = $region33
    $region32: #{tpu_custom_call.1} parent=1 // pred_region
      %76 = vst [vmem:[#allocation3] sm:$0xff] 0.0
      %77 = vst [vmem:[#allocation4] sm:$0xff] 0.0
    $region33: #{tpu_custom_call.1} parent=1 // pred_fallthru
      _
    %v78 = vld [vmem:[%s68] sm:$0xf]
    %v79 = vld [vmem:[%s68 + $0x4] sm:$0xf]
    %v80 = vld [vmem:[%s68 + $0x8] sm:$0xf]
    %v81 = vld [vmem:[%s68 + $0xc] sm:$0xf]
    %v82 = vld [vmem:[%s68 + $0x10] sm:$0xf]
    %v83 = vld [vmem:[%s68 + $0x14] sm:$0xf]
    %v84 = vld [vmem:[%s68 + $0x18] sm:$0xf]
    %v85 = vld [vmem:[%s68 + $0x1c] sm:$0xf]
    %v86 = vld [vmem:[%s1] sm:$0xff]
    %v87 = vld [vmem:[%s1 + $0x8] sm:$0xff]
    %v88 = vld [vmem:[%s1 + $0x10] sm:$0xff]
    %v89 = vld [vmem:[%s1 + $0x18] sm:$0xff]
    %v90 = vld [vmem:[%s3] sm:$0xf]
    %v92 = vlaneseq
    %v93 = vshrl.u32 %v92, 7
    %v94 = vsub.s32 0, %v93
    %v95 = vrot.slane %v90, %v94
    %v96 = vlaneseq
    %v97 = vshrl.u32 %v96, 7
    %v98 = vsub.s32 1, %v97
    %v99 = vrot.slane %v90, %v98
    %v100 = vlaneseq
    %v101 = vshrl.u32 %v100, 7
    %v102 = vsub.s32 2, %v101
    %v103 = vrot.slane %v90, %v102
    %v104 = vlaneseq
    %v105 = vshrl.u32 %v104, 7
    %v106 = vsub.s32 3, %v105
    %v107 = vrot.slane %v90, %v106
    %v120 = vunpack.c.l.b16 %v78
    %v121 = vunpack.c.l.b16 %v79
    %v122 = vunpack.c.l.b16 %v80
    %v123 = vunpack.c.l.b16 %v81
    %v124 = vunpack.c.l.b16 %v82
    %v125 = vunpack.c.l.b16 %v83
    %v126 = vunpack.c.l.b16 %v84
    %v127 = vunpack.c.l.b16 %v85
    %v128 = vpack.c.b16 %v121, %v120
    %v129 = vpack.c.b16 %v123, %v122
    %v130 = vpack.c.b16 %v125, %v124
    %v131 = vpack.c.b16 %v127, %v126
    %v136 = vunpack.c.l.b16 %v86
    %v137 = vunpack.c.h.b16 %v86
    %v138 = vunpack.c.l.b16 %v87
    %v139 = vunpack.c.h.b16 %v87
    %v140 = vunpack.c.l.b16 %v88
    %v141 = vunpack.c.h.b16 %v88
    %v142 = vunpack.c.l.b16 %v89
    %v143 = vunpack.c.h.b16 %v89
    %v144 = vpack.c.b16 %v140, %v136
    %v145 = vpack.c.b16 %v141, %v137
    %v146 = vpack.c.b16 %v142, %v138
    %v147 = vpack.c.b16 %v143, %v139
    %vm152 = vcmask 130048
    %v154 = vsel %vm152, %v128, 0
    %v157 = vsel %vm152, %v129, 0
    %v160 = vsel %vm152, %v130, 0
    %v163 = vsel %vm152, %v131, 0
    %165 = vmatprep.subr.bf16.mxu0 %v145
    %166 = vmatpush1.bf16.msra.mxu0 %v144
    %167 = vmatprep.subr.bf16.mxu0 0
    %168 = vmatpush1.bf16.msra.mxu0 0
    %169 = vmatprep.subr.bf16.mxu0 0
    %170 = vmatpush1.bf16.msra.mxu0 0
    %171 = vmatprep.subr.bf16.mxu0 0
    %172 = vmatpush1.bf16.msra.mxu0 0
    %173 = vmatprep.subr.bf16.mxu0 0
    %174 = vmatpush1.bf16.msra.mxu0 0
    %175 = vmatprep.subr.bf16.mxu0 0
    %176 = vmatpush1.bf16.msra.mxu0 0
    %177 = vmatprep.subr.bf16.mxu0 0
    %178 = vmatpush1.bf16.msra.mxu0 0
    %179 = vmatprep.subr.bf16.mxu0 0
    %180 = vmatpush1.bf16.msra.mxu0 0
    %181 = vmatprep.subr.bf16.mxu0 0
    %182 = vmatpush1.bf16.msra.mxu0 0
    %183 = vmatprep.subr.bf16.mxu0 0
    %184 = vmatpush1.bf16.msra.mxu0 0
    %185 = vmatprep.subr.bf16.mxu0 0
    %186 = vmatpush1.bf16.msra.mxu0 0
    %187 = vmatprep.subr.bf16.mxu0 0
    %188 = vmatpush1.bf16.msra.mxu0 0
    %189 = vmatprep.subr.bf16.mxu0 0
    %190 = vmatpush1.bf16.msra.mxu0 0
    %191 = vmatprep.subr.bf16.mxu0 0
    %192 = vmatpush1.bf16.msra.mxu0 0
    %193 = vmatprep.subr.bf16.mxu0 0
    %194 = vmatpush1.bf16.msra.mxu0 0
    %195 = vmatprep.subr.bf16.mxu0 0
    %196 = vmatpush1.bf16.msra.mxu0 0
    %197 = vmatprep.mubr.bf16.mxu0 0
    %198 = vmatmul.mubr.bf16.gmra.mrb[0].mxu0 %v154
    %v199 = vpop.f32.mrb[0].mxu0
    %v200 = vadd.f32 %v95, %v199
    %v201 = vpop.f32.mrb[0].mxu0
    %v202 = vadd.f32 %v99, %v201
    %v203 = vpop.f32.mrb[0].mxu0
    %v204 = vadd.f32 %v95, %v203
    %v205 = vpop.f32.mrb[0].mxu0
    %v206 = vadd.f32 %v99, %v205
    %207 = vmatprep.mubr.bf16.mxu0 0
    %208 = vmatmul.mubr.bf16.gmra.mrb[0].mxu0 %v157
    %v209 = vpop.f32.mrb[0].mxu0
    %v210 = vadd.f32 %v95, %v209
    %v211 = vpop.f32.mrb[0].mxu0
    %v212 = vadd.f32 %v99, %v211
    %v213 = vpop.f32.mrb[0].mxu0
    %v214 = vadd.f32 %v95, %v213
    %v215 = vpop.f32.mrb[0].mxu0
    %v216 = vadd.f32 %v99, %v215
    %217 = vmatprep.mubr.bf16.mxu0 0
    %218 = vmatmul.mubr.bf16.gmra.mrb[0].mxu0 %v160
    %v219 = vpop.f32.mrb[0].mxu0
    %v220 = vadd.f32 %v95, %v219
    %v221 = vpop.f32.mrb[0].mxu0
    %v222 = vadd.f32 %v99, %v221
    %v223 = vpop.f32.mrb[0].mxu0
    %v224 = vadd.f32 %v95, %v223
    %v225 = vpop.f32.mrb[0].mxu0
    %v226 = vadd.f32 %v99, %v225
    %227 = vmatprep.mubr.bf16.mxu0 0
    %228 = vmatmul.mubr.bf16.gmra.mrb[0].mxu0 %v163
    %v229 = vpop.f32.mrb[0].mxu0
    %v230 = vadd.f32 %v95, %v229
    %v231 = vpop.f32.mrb[0].mxu0
    %v232 = vadd.f32 %v99, %v231
    %v233 = vpop.f32.mrb[0].mxu0
    %v234 = vadd.f32 %v95, %v233
    %v235 = vpop.f32.mrb[0].mxu0
    %v236 = vadd.f32 %v99, %v235
    %237 = vdwg.mxu0
    %238 = vmatprep.subr.bf16.mxu0 %v147
    %239 = vmatpush1.bf16.msra.mxu0 %v146
    %240 = vmatprep.subr.bf16.mxu0 0
    %241 = vmatpush1.bf16.msra.mxu0 0
    %242 = vmatprep.subr.bf16.mxu0 0
    %243 = vmatpush1.bf16.msra.mxu0 0
    %244 = vmatprep.subr.bf16.mxu0 0
    %245 = vmatpush1.bf16.msra.mxu0 0
    %246 = vmatprep.subr.bf16.mxu0 0
    %247 = vmatpush1.bf16.msra.mxu0 0
    %248 = vmatprep.subr.bf16.mxu0 0
    %249 = vmatpush1.bf16.msra.mxu0 0
    %250 = vmatprep.subr.bf16.mxu0 0
    %251 = vmatpush1.bf16.msra.mxu0 0
    %252 = vmatprep.subr.bf16.mxu0 0
    %253 = vmatpush1.bf16.msra.mxu0 0
    %254 = vmatprep.subr.bf16.mxu0 0
    %255 = vmatpush1.bf16.msra.mxu0 0
    %256 = vmatprep.subr.bf16.mxu0 0
    %257 = vmatpush1.bf16.msra.mxu0 0
    %258 = vmatprep.subr.bf16.mxu0 0
    %259 = vmatpush1.bf16.msra.mxu0 0
    %260 = vmatprep.subr.bf16.mxu0 0
    %261 = vmatpush1.bf16.msra.mxu0 0
    %262 = vmatprep.subr.bf16.mxu0 0
    %263 = vmatpush1.bf16.msra.mxu0 0
    %264 = vmatprep.subr.bf16.mxu0 0
    %265 = vmatpush1.bf16.msra.mxu0 0
    %266 = vmatprep.subr.bf16.mxu0 0
    %267 = vmatpush1.bf16.msra.mxu0 0
    %268 = vmatprep.subr.bf16.mxu0 0
    %269 = vmatpush1.bf16.msra.mxu0 0
    %270 = vmatprep.mubr.bf16.mxu0 0
    %271 = vmatmul.mubr.bf16.gmra.mrb[0].mxu0 %v154
    %v272 = vpop.f32.mrb[0].mxu0
    %v273 = vadd.f32 %v103, %v272
    %v274 = vpop.f32.mrb[0].mxu0
    %v275 = vadd.f32 %v107, %v274
    %v276 = vpop.f32.mrb[0].mxu0
    %v277 = vadd.f32 %v103, %v276
    %v278 = vpop.f32.mrb[0].mxu0
    %v279 = vadd.f32 %v107, %v278
    %280 = vmatprep.mubr.bf16.mxu0 0
    %281 = vmatmul.mubr.bf16.gmra.mrb[0].mxu0 %v157
    %v282 = vpop.f32.mrb[0].mxu0
    %v283 = vadd.f32 %v103, %v282
    %v284 = vpop.f32.mrb[0].mxu0
    %v285 = vadd.f32 %v107, %v284
    %v286 = vpop.f32.mrb[0].mxu0
    %v287 = vadd.f32 %v103, %v286
    %v288 = vpop.f32.mrb[0].mxu0
    %v289 = vadd.f32 %v107, %v288
    %290 = vmatprep.mubr.bf16.mxu0 0
    %291 = vmatmul.mubr.bf16.gmra.mrb[0].mxu0 %v160
    %v292 = vpop.f32.mrb[0].mxu0
    %v293 = vadd.f32 %v103, %v292
    %v294 = vpop.f32.mrb[0].mxu0
    %v295 = vadd.f32 %v107, %v294
    %v296 = vpop.f32.mrb[0].mxu0
    %v297 = vadd.f32 %v103, %v296
    %v298 = vpop.f32.mrb[0].mxu0
    %v299 = vadd.f32 %v107, %v298
    %300 = vmatprep.mubr.bf16.mxu0 0
    %301 = vmatmul.mubr.bf16.gmra.mrb[0].mxu0 %v163
    %v302 = vpop.f32.mrb[0].mxu0
    %v303 = vadd.f32 %v103, %v302
    %v304 = vpop.f32.mrb[0].mxu0
    %v305 = vadd.f32 %v107, %v304
    %v306 = vpop.f32.mrb[0].mxu0
    %v307 = vadd.f32 %v103, %v306
    %v308 = vpop.f32.mrb[0].mxu0
    %v309 = vadd.f32 %v107, %v308
    %310 = vdwg.mxu0
    %311 = vst [vmem:[#allocation2] sm:$0xff] %v200
    %312 = vst [vmem:[#allocation2 + $0x8] sm:$0xff] %v202
    %313 = vst [vmem:[#allocation2 + $0x10] sm:$0xff] %v273
    %314 = vst [vmem:[#allocation2 + $0x18] sm:$0xff] %v275
    %315 = vst [vmem:[#allocation2 + $0x20] sm:$0xff] %v204
    %316 = vst [vmem:[#allocation2 + $0x28] sm:$0xff] %v206
    %317 = vst [vmem:[#allocation2 + $0x30] sm:$0xff] %v277
    %318 = vst [vmem:[#allocation2 + $0x38] sm:$0xff] %v279
    %319 = vst [vmem:[#allocation2 + $0x40] sm:$0xff] %v210
    %320 = vst [vmem:[#allocation2 + $0x48] sm:$0xff] %v212
    %321 = vst [vmem:[#allocation2 + $0x50] sm:$0xff] %v283
    %322 = vst [vmem:[#allocation2 + $0x58] sm:$0xff] %v285
    %323 = vst [vmem:[#allocation2 + $0x60] sm:$0xff] %v214
    %324 = vst [vmem:[#allocation2 + $0x68] sm:$0xff] %v216
    %325 = vst [vmem:[#allocation2 + $0x70] sm:$0xff] %v287
    %326 = vst [vmem:[#allocation2 + $0x78] sm:$0xff] %v289
    %327 = vst [vmem:[#allocation2 + $0x80] sm:$0xff] %v220
    %328 = vst [vmem:[#allocation2 + $0x88] sm:$0xff] %v222
    %329 = vst [vmem:[#allocation2 + $0x90] sm:$0xff] %v293
    %330 = vst [vmem:[#allocation2 + $0x98] sm:$0xff] %v295
    %331 = vst [vmem:[#allocation2 + $0xa0] sm:$0xff] %v224
    %332 = vst [vmem:[#allocation2 + $0xa8] sm:$0xff] %v226
    %333 = vst [vmem:[#allocation2 + $0xb0] sm:$0xff] %v297
    %334 = vst [vmem:[#allocation2 + $0xb8] sm:$0xff] %v299
    %335 = vst [vmem:[#allocation2 + $0xc0] sm:$0xff] %v230
    %336 = vst [vmem:[#allocation2 + $0xc8] sm:$0xff] %v232
    %337 = vst [vmem:[#allocation2 + $0xd0] sm:$0xff] %v303
    %338 = vst [vmem:[#allocation2 + $0xd8] sm:$0xff] %v305
    %339 = vst [vmem:[#allocation2 + $0xe0] sm:$0xff] %v234
    %340 = vst [vmem:[#allocation2 + $0xe8] sm:$0xff] %v236
    %341 = vst [vmem:[#allocation2 + $0xf0] sm:$0xff] %v307
    %342 = vst [vmem:[#allocation2 + $0xf8] sm:$0xff] %v309
    %v343 = vld [vmem:[#allocation3] sm:$0xff]
    %v344 = vld [vmem:[#allocation4] sm:$0xff]
    %s345 = smul.u32 0, 4
    %s346 = smul.addr %s345, 8
    %s347 = scalar_lea.vmem [#allocation2], %s346
    %v348 = vld [vmem:[%s347] sm:$0xff]
    %v349 = vld [vmem:[%s347 + $0x8] sm:$0xff]
    %v350 = vld [vmem:[%s347 + $0x10] sm:$0xff]
    %v351 = vld [vmem:[%s347 + $0x18] sm:$0xff]
    %v352 = vpack.c.bf16 %v343, %v343
    %v353 = vld [vmem:[#allocation5] sm:$0xff]
    %v354 = vld [vmem:[#allocation5 + $0x8] sm:$0xff]
    %v355 = vld [vmem:[#allocation5 + $0x10] sm:$0xff]
    %v356 = vld [vmem:[#allocation5 + $0x18] sm:$0xff]
    %v357 = vld [vmem:[#allocation5 + $0x20] sm:$0xff]
    %v358 = vld [vmem:[#allocation5 + $0x28] sm:$0xff]
    %v359 = vld [vmem:[#allocation5 + $0x30] sm:$0xff]
    %v360 = vld [vmem:[#allocation5 + $0x38] sm:$0xff]
    %v361 = vld [vmem:[#allocation5 + $0x40] sm:$0xff]
    %v362 = vld [vmem:[#allocation5 + $0x48] sm:$0xff]
    %v363 = vld [vmem:[#allocation5 + $0x50] sm:$0xff]
    %v364 = vld [vmem:[#allocation5 + $0x58] sm:$0xff]
    %v365 = vld [vmem:[#allocation5 + $0x60] sm:$0xff]
    %v366 = vld [vmem:[#allocation5 + $0x68] sm:$0xff]
    %v367 = vld [vmem:[#allocation5 + $0x70] sm:$0xff]
    %v368 = vld [vmem:[#allocation5 + $0x78] sm:$0xff]
    %v369 = vld [vmem:[#allocation5 + $0x80] sm:$0xff]
    %v370 = vld [vmem:[#allocation5 + $0x88] sm:$0xff]
    %v371 = vld [vmem:[#allocation5 + $0x90] sm:$0xff]
    %v372 = vld [vmem:[#allocation5 + $0x98] sm:$0xff]
    %v373 = vld [vmem:[#allocation5 + $0xa0] sm:$0xff]
    %v374 = vld [vmem:[#allocation5 + $0xa8] sm:$0xff]
    %v375 = vld [vmem:[#allocation5 + $0xb0] sm:$0xff]
    %v376 = vld [vmem:[#allocation5 + $0xb8] sm:$0xff]
    %v377 = vld [vmem:[#allocation5 + $0xc0] sm:$0xff]
    %v378 = vld [vmem:[#allocation5 + $0xc8] sm:$0xff]
    %v379 = vld [vmem:[#allocation5 + $0xd0] sm:$0xff]
    %v380 = vld [vmem:[#allocation5 + $0xd8] sm:$0xff]
    %v381 = vld [vmem:[#allocation5 + $0xe0] sm:$0xff]
    %v382 = vld [vmem:[#allocation5 + $0xe8] sm:$0xff]
    %v383 = vld [vmem:[#allocation5 + $0xf0] sm:$0xff]
    %v384 = vld [vmem:[#allocation5 + $0xf8] sm:$0xff]
    %v417 = vunpack.c.l.b16 %v353
    %v418 = vunpack.c.h.b16 %v353
    %v419 = vunpack.c.l.b16 %v354
    %v420 = vunpack.c.h.b16 %v354
    %v421 = vunpack.c.l.b16 %v355
    %v422 = vunpack.c.h.b16 %v355
    %v423 = vunpack.c.l.b16 %v356
    %v424 = vunpack.c.h.b16 %v356
    %v425 = vunpack.c.l.b16 %v357
    %v426 = vunpack.c.h.b16 %v357
    %v427 = vunpack.c.l.b16 %v358
    %v428 = vunpack.c.h.b16 %v358
    %v429 = vunpack.c.l.b16 %v359
    %v430 = vunpack.c.h.b16 %v359
    %v431 = vunpack.c.l.b16 %v360
    %v432 = vunpack.c.h.b16 %v360
    %v433 = vunpack.c.l.b16 %v361
    %v434 = vunpack.c.h.b16 %v361
    %v435 = vunpack.c.l.b16 %v362
    %v436 = vunpack.c.h.b16 %v362
    %v437 = vunpack.c.l.b16 %v363
    %v438 = vunpack.c.h.b16 %v363
    %v439 = vunpack.c.l.b16 %v364
    %v440 = vunpack.c.h.b16 %v364
    %v441 = vunpack.c.l.b16 %v365
    %v442 = vunpack.c.h.b16 %v365
    %v443 = vunpack.c.l.b16 %v366
    %v444 = vunpack.c.h.b16 %v366
    %v445 = vunpack.c.l.b16 %v367
    %v446 = vunpack.c.h.b16 %v367
    %v447 = vunpack.c.l.b16 %v368
    %v448 = vunpack.c.h.b16 %v368
    %v449 = vunpack.c.l.b16 %v369
    %v450 = vunpack.c.h.b16 %v369
    %v451 = vunpack.c.l.b16 %v370
    %v452 = vunpack.c.h.b16 %v370
    %v453 = vunpack.c.l.b16 %v371
    %v454 = vunpack.c.h.b16 %v371
    %v455 = vunpack.c.l.b16 %v372
    %v456 = vunpack.c.h.b16 %v372
    %v457 = vunpack.c.l.b16 %v373
    %v458 = vunpack.c.h.b16 %v373
    %v459 = vunpack.c.l.b16 %v374
    %v460 = vunpack.c.h.b16 %v374
    %v461 = vunpack.c.l.b16 %v375
    %v462 = vunpack.c.h.b16 %v375
    %v463 = vunpack.c.l.b16 %v376
    %v464 = vunpack.c.h.b16 %v376
    %v465 = vunpack.c.l.b16 %v377
    %v466 = vunpack.c.h.b16 %v377
    %v467 = vunpack.c.l.b16 %v378
    %v468 = vunpack.c.h.b16 %v378
    %v469 = vunpack.c.l.b16 %v379
    %v470 = vunpack.c.h.b16 %v379
    %v471 = vunpack.c.l.b16 %v380
    %v472 = vunpack.c.h.b16 %v380
    %v473 = vunpack.c.l.b16 %v381
    %v474 = vunpack.c.h.b16 %v381
    %v475 = vunpack.c.l.b16 %v382
    %v476 = vunpack.c.h.b16 %v382
    %v477 = vunpack.c.l.b16 %v383
    %v478 = vunpack.c.h.b16 %v383
    %v479 = vunpack.c.l.b16 %v384
    %v480 = vunpack.c.h.b16 %v384
    %v481 = vpack.c.b16 %v421, %v417
    %v482 = vpack.c.b16 %v422, %v418
    %v483 = vpack.c.b16 %v423, %v419
    %v484 = vpack.c.b16 %v424, %v420
    %v485 = vpack.c.b16 %v429, %v425
    %v486 = vpack.c.b16 %v430, %v426
    %v487 = vpack.c.b16 %v431, %v427
    %v488 = vpack.c.b16 %v432, %v428
    %v489 = vpack.c.b16 %v437, %v433
    %v490 = vpack.c.b16 %v438, %v434
    %v491 = vpack.c.b16 %v439, %v435
    %v492 = vpack.c.b16 %v440, %v436
    %v493 = vpack.c.b16 %v445, %v441
    %v494 = vpack.c.b16 %v446, %v442
    %v495 = vpack.c.b16 %v447, %v443
    %v496 = vpack.c.b16 %v448, %v444
    %v497 = vpack.c.b16 %v453, %v449
    %v498 = vpack.c.b16 %v454, %v450
    %v499 = vpack.c.b16 %v455, %v451
    %v500 = vpack.c.b16 %v456, %v452
    %v501 = vpack.c.b16 %v461, %v457
    %v502 = vpack.c.b16 %v462, %v458
    %v503 = vpack.c.b16 %v463, %v459
    %v504 = vpack.c.b16 %v464, %v460
    %v505 = vpack.c.b16 %v469, %v465
    %v506 = vpack.c.b16 %v470, %v466
    %v507 = vpack.c.b16 %v471, %v467
    %v508 = vpack.c.b16 %v472, %v468
    %v509 = vpack.c.b16 %v477, %v473
    %v510 = vpack.c.b16 %v478, %v474
    %v511 = vpack.c.b16 %v479, %v475
    %v512 = vpack.c.b16 %v480, %v476
    %545 = vmatprep.subr.bf16.mxu0 %v482
    %546 = vmatpush1.bf16.msra.mxu0 %v481
    %547 = vmatprep.subr.bf16.mxu0 %v486
    %548 = vmatpush1.bf16.msra.mxu0 %v485
    %549 = vmatprep.subr.bf16.mxu0 %v490
    %550 = vmatpush1.bf16.msra.mxu0 %v489
    %551 = vmatprep.subr.bf16.mxu0 %v494
    %552 = vmatpush1.bf16.msra.mxu0 %v493
    %553 = vmatprep.subr.bf16.mxu0 %v498
    %554 = vmatpush1.bf16.msra.mxu0 %v497
    %555 = vmatprep.subr.bf16.mxu0 %v502
    %556 = vmatpush1.bf16.msra.mxu0 %v501
    %557 = vmatprep.subr.bf16.mxu0 %v506
    %558 = vmatpush1.bf16.msra.mxu0 %v505
    %559 = vmatprep.subr.bf16.mxu0 %v510
    %560 = vmatpush1.bf16.msra.mxu0 %v509
    %561 = vmatprep.subr.bf16.mxu0 0
    %562 = vmatpush1.bf16.msra.mxu0 0
    %563 = vmatprep.subr.bf16.mxu0 0
    %564 = vmatpush1.bf16.msra.mxu0 0
    %565 = vmatprep.subr.bf16.mxu0 0
    %566 = vmatpush1.bf16.msra.mxu0 0
    %567 = vmatprep.subr.bf16.mxu0 0
    %568 = vmatpush1.bf16.msra.mxu0 0
    %569 = vmatprep.subr.bf16.mxu0 0
    %570 = vmatpush1.bf16.msra.mxu0 0
    %571 = vmatprep.subr.bf16.mxu0 0
    %572 = vmatpush1.bf16.msra.mxu0 0
    %573 = vmatprep.subr.bf16.mxu0 0
    %574 = vmatpush1.bf16.msra.mxu0 0
    %575 = vmatprep.subr.bf16.mxu0 0
    %576 = vmatpush1.bf16.msra.mxu0 0
    %577 = vmatprep.mubr.bf16.mxu0 0
    %578 = vmatmul.mubr.bf16.gmra.mrb[0].mxu0 %v352
    %v579 = vpop.f32.mrb[0].mxu0
    %v580 = vadd.f32 0.0, %v579
    %v581 = vpop.f32.mrb[0].mxu0
    %v582 = vadd.f32 0.0, %v581
    %v583 = vpop.f32.mrb[0].mxu0
    %v584 = vpop.f32.mrb[0].mxu0
    %585 = vdwg.mxu0
    %586 = vmatprep.subr.bf16.mxu0 %v484
    %587 = vmatpush1.bf16.msra.mxu0 %v483
    %588 = vmatprep.subr.bf16.mxu0 %v488
    %589 = vmatpush1.bf16.msra.mxu0 %v487
    %590 = vmatprep.subr.bf16.mxu0 %v492
    %591 = vmatpush1.bf16.msra.mxu0 %v491
    %592 = vmatprep.subr.bf16.mxu0 %v496
    %593 = vmatpush1.bf16.msra.mxu0 %v495
    %594 = vmatprep.subr.bf16.mxu0 %v500
    %595 = vmatpush1.bf16.msra.mxu0 %v499
    %596 = vmatprep.subr.bf16.mxu0 %v504
    %597 = vmatpush1.bf16.msra.mxu0 %v503
    %598 = vmatprep.subr.bf16.mxu0 %v508
    %599 = vmatpush1.bf16.msra.mxu0 %v507
    %600 = vmatprep.subr.bf16.mxu0 %v512
    %601 = vmatpush1.bf16.msra.mxu0 %v511
    %602 = vmatprep.subr.bf16.mxu0 0
    %603 = vmatpush1.bf16.msra.mxu0 0
    %604 = vmatprep.subr.bf16.mxu0 0
    %605 = vmatpush1.bf16.msra.mxu0 0
    %606 = vmatprep.subr.bf16.mxu0 0
    %607 = vmatpush1.bf16.msra.mxu0 0
    %608 = vmatprep.subr.bf16.mxu0 0
    %609 = vmatpush1.bf16.msra.mxu0 0
    %610 = vmatprep.subr.bf16.mxu0 0
    %611 = vmatpush1.bf16.msra.mxu0 0
    %612 = vmatprep.subr.bf16.mxu0 0
    %613 = vmatpush1.bf16.msra.mxu0 0
    %614 = vmatprep.subr.bf16.mxu0 0
    %615 = vmatpush1.bf16.msra.mxu0 0
    %616 = vmatprep.subr.bf16.mxu0 0
    %617 = vmatpush1.bf16.msra.mxu0 0
    %618 = vmatprep.mubr.bf16.mxu0 0
    %619 = vmatmul.mubr.bf16.gmra.mrb[0].mxu0 %v352
    %v620 = vpop.f32.mrb[0].mxu0
    %v621 = vadd.f32 0.0, %v620
    %v622 = vpop.f32.mrb[0].mxu0
    %v623 = vadd.f32 0.0, %v622
    %v624 = vpop.f32.mrb[0].mxu0
    %v625 = vpop.f32.mrb[0].mxu0
    %626 = vdwg.mxu0
    %v627 = vadd.f32 %v348, %v580
    %v628 = vadd.f32 %v349, %v582
    %v629 = vadd.f32 %v350, %v621
    %v630 = vadd.f32 %v351, %v623
    %v631 = vxor.u32 %v627, 2147483648
    %v632 = vxor.u32 %v628, 2147483648
    %v633 = vxor.u32 %v629, 2147483648
    %v634 = vmul.f32 %v631, 1.442695
    %v635 = vpow.pop %v634
    %v636 = vmul.f32 %v632, 1.442695
    %v637 = vpow.pop %v636
    %v638 = vmul.f32 %v633, 1.442695
    %v639 = vpow.pop %v638
    %v640 = vadd.f32 %v635, 1.0
    %v641 = vadd.f32 %v637, 1.0
    %v642 = vadd.f32 %v639, 1.0
    %v643 = vrcp.pop %v640
    %v644 = vmul.f32 1.0, %v643
    %v645 = vrcp.pop %v641
    %v646 = vmul.f32 1.0, %v645
    %v647 = vrcp.pop %v642
    %v648 = vmul.f32 1.0, %v647
    %v649 = vtanh.pop %v630
    %v650 = vmul.f32 %v646, %v344
    %v651 = vmul.f32 %v644, %v649
    %v652 = vadd.f32 %v650, %v651
    %v653 = vtanh.pop %v652
    %v654 = vmul.f32 %v648, %v653
    %s655 = smul.u32 1, 4
    %s656 = smul.addr %s655, 8
    %s657 = scalar_lea.vmem [#allocation2], %s656
    %v658 = vld [vmem:[%s657] sm:$0xff]
    %v659 = vld [vmem:[%s657 + $0x8] sm:$0xff]
    %v660 = vld [vmem:[%s657 + $0x10] sm:$0xff]
    %v661 = vld [vmem:[%s657 + $0x18] sm:$0xff]
    %v662 = vpack.c.bf16 %v654, %v654
    %663 = vmatprep.subr.bf16.mxu0 %v482
    %664 = vmatpush1.bf16.msra.mxu0 %v481
    %665 = vmatprep.subr.bf16.mxu0 %v486
    %666 = vmatpush1.bf16.msra.mxu0 %v485
    %667 = vmatprep.subr.bf16.mxu0 %v490
    %668 = vmatpush1.bf16.msra.mxu0 %v489
    %669 = vmatprep.subr.bf16.mxu0 %v494
    %670 = vmatpush1.bf16.msra.mxu0 %v493
    %671 = vmatprep.subr.bf16.mxu0 %v498
    %672 = vmatpush1.bf16.msra.mxu0 %v497
    %673 = vmatprep.subr.bf16.mxu0 %v502
    %674 = vmatpush1.bf16.msra.mxu0 %v501
    %675 = vmatprep.subr.bf16.mxu0 %v506
    %676 = vmatpush1.bf16.msra.mxu0 %v505
    %677 = vmatprep.subr.bf16.mxu0 %v510
    %678 = vmatpush1.bf16.msra.mxu0 %v509
    %679 = vmatprep.subr.bf16.mxu0 0
    %680 = vmatpush1.bf16.msra.mxu0 0
    %681 = vmatprep.subr.bf16.mxu0 0
    %682 = vmatpush1.bf16.msra.mxu0 0
    %683 = vmatprep.subr.bf16.mxu0 0
    %684 = vmatpush1.bf16.msra.mxu0 0
    %685 = vmatprep.subr.bf16.mxu0 0
    %686 = vmatpush1.bf16.msra.mxu0 0
    %687 = vmatprep.subr.bf16.mxu0 0
    %688 = vmatpush1.bf16.msra.mxu0 0
    %689 = vmatprep.subr.bf16.mxu0 0
    %690 = vmatpush1.bf16.msra.mxu0 0
    %691 = vmatprep.subr.bf16.mxu0 0
    %692 = vmatpush1.bf16.msra.mxu0 0
    %693 = vmatprep.subr.bf16.mxu0 0
    %694 = vmatpush1.bf16.msra.mxu0 0
    %695 = vmatprep.mubr.bf16.mxu0 0
    %696 = vmatmul.mubr.bf16.gmra.mrb[0].mxu0 %v662
    %v697 = vpop.f32.mrb[0].mxu0
    %v698 = vadd.f32 0.0, %v697
    %v699 = vpop.f32.mrb[0].mxu0
    %v700 = vadd.f32 0.0, %v699
    %v701 = vpop.f32.mrb[0].mxu0
    %v702 = vpop.f32.mrb[0].mxu0
    %703 = vdwg.mxu0
    %704 = vmatprep.subr.bf16.mxu0 %v484
    %705 = vmatpush1.bf16.msra.mxu0 %v483
    %706 = vmatprep.subr.bf16.mxu0 %v488
    %707 = vmatpush1.bf16.msra.mxu0 %v487
    %708 = vmatprep.subr.bf16.mxu0 %v492
    %709 = vmatpush1.bf16.msra.mxu0 %v491
    %710 = vmatprep.subr.bf16.mxu0 %v496
    %711 = vmatpush1.bf16.msra.mxu0 %v495
    %712 = vmatprep.subr.bf16.mxu0 %v500
    %713 = vmatpush1.bf16.msra.mxu0 %v499
    %714 = vmatprep.subr.bf16.mxu0 %v504
    %715 = vmatpush1.bf16.msra.mxu0 %v503
    %716 = vmatprep.subr.bf16.mxu0 %v508
    %717 = vmatpush1.bf16.msra.mxu0 %v507
    %718 = vmatprep.subr.bf16.mxu0 %v512
    %719 = vmatpush1.bf16.msra.mxu0 %v511
    %720 = vmatprep.subr.bf16.mxu0 0
    %721 = vmatpush1.bf16.msra.mxu0 0
    %722 = vmatprep.subr.bf16.mxu0 0
    %723 = vmatpush1.bf16.msra.mxu0 0
    %724 = vmatprep.subr.bf16.mxu0 0
    %725 = vmatpush1.bf16.msra.mxu0 0
    %726 = vmatprep.subr.bf16.mxu0 0
    %727 = vmatpush1.bf16.msra.mxu0 0
    %728 = vmatprep.subr.bf16.mxu0 0
    %729 = vmatpush1.bf16.msra.mxu0 0
    %730 = vmatprep.subr.bf16.mxu0 0
    %731 = vmatpush1.bf16.msra.mxu0 0
    %732 = vmatprep.subr.bf16.mxu0 0
    %733 = vmatpush1.bf16.msra.mxu0 0
    %734 = vmatprep.subr.bf16.mxu0 0
    %735 = vmatpush1.bf16.msra.mxu0 0
    %736 = vmatprep.mubr.bf16.mxu0 0
    %737 = vmatmul.mubr.bf16.gmra.mrb[0].mxu0 %v662
    %v738 = vpop.f32.mrb[0].mxu0
    %v739 = vadd.f32 0.0, %v738
    %v740 = vpop.f32.mrb[0].mxu0
    %v741 = vadd.f32 0.0, %v740
    %v742 = vpop.f32.mrb[0].mxu0
    %v743 = vpop.f32.mrb[0].mxu0
    %744 = vdwg.mxu0
    %v745 = vadd.f32 %v658, %v698
    %v746 = vadd.f32 %v659, %v700
    %v747 = vadd.f32 %v660, %v739
    %v748 = vadd.f32 %v661, %v741
    %v749 = vxor.u32 %v745, 2147483648
    %v750 = vxor.u32 %v746, 2147483648
    %v751 = vxor.u32 %v747, 2147483648
    %v752 = vmul.f32 %v749, 1.442695
    %v753 = vpow.pop %v752
    %v754 = vmul.f32 %v750, 1.442695
    %v755 = vpow.pop %v754
    %v756 = vmul.f32 %v751, 1.442695
    %v757 = vpow.pop %v756
    %v758 = vadd.f32 %v753, 1.0
    %v759 = vadd.f32 %v755, 1.0
    %v760 = vadd.f32 %v757, 1.0
    %v761 = vrcp.pop %v758
    %v762 = vmul.f32 1.0, %v761
    %v763 = vrcp.pop %v759
    %v764 = vmul.f32 1.0, %v763
    %v765 = vrcp.pop %v760
    %v766 = vmul.f32 1.0, %v765
    %v767 = vtanh.pop %v748
    %v768 = vmul.f32 %v764, %v652
    %v769 = vmul.f32 %v762, %v767
    %v770 = vadd.f32 %v768, %v769
    %v771 = vtanh.pop %v770
    %v772 = vmul.f32 %v766, %v771
    %s773 = smul.u32 2, 4
    %s774 = smul.addr %s773, 8
    %s775 = scalar_lea.vmem [#allocation2], %s774
    %v776 = vld [vmem:[%s775] sm:$0xff]
    %v777 = vld [vmem:[%s775 + $0x8] sm:$0xff]
    %v778 = vld [vmem:[%s775 + $0x10] sm:$0xff]
    %v779 = vld [vmem:[%s775 + $0x18] sm:$0xff]
    %v780 = vpack.c.bf16 %v772, %v772
    %781 = vmatprep.subr.bf16.mxu0 %v482
    %782 = vmatpush1.bf16.msra.mxu0 %v481
    %783 = vmatprep.subr.bf16.mxu0 %v486
    %784 = vmatpush1.bf16.msra.mxu0 %v485
    %785 = vmatprep.subr.bf16.mxu0 %v490
    %786 = vmatpush1.bf16.msra.mxu0 %v489
    %787 = vmatprep.subr.bf16.mxu0 %v494
    %788 = vmatpush1.bf16.msra.mxu0 %v493
    %789 = vmatprep.subr.bf16.mxu0 %v498
    %790 = vmatpush1.bf16.msra.mxu0 %v497
    %791 = vmatprep.subr.bf16.mxu0 %v502
    %792 = vmatpush1.bf16.msra.mxu0 %v501
    %793 = vmatprep.subr.bf16.mxu0 %v506
    %794 = vmatpush1.bf16.msra.mxu0 %v505
    %795 = vmatprep.subr.bf16.mxu0 %v510
    %796 = vmatpush1.bf16.msra.mxu0 %v509
    %797 = vmatprep.subr.bf16.mxu0 0
    %798 = vmatpush1.bf16.msra.mxu0 0
    %799 = vmatprep.subr.bf16.mxu0 0
    %800 = vmatpush1.bf16.msra.mxu0 0
    %801 = vmatprep.subr.bf16.mxu0 0
    %802 = vmatpush1.bf16.msra.mxu0 0
    %803 = vmatprep.subr.bf16.mxu0 0
    %804 = vmatpush1.bf16.msra.mxu0 0
    %805 = vmatprep.subr.bf16.mxu0 0
    %806 = vmatpush1.bf16.msra.mxu0 0
    %807 = vmatprep.subr.bf16.mxu0 0
    %808 = vmatpush1.bf16.msra.mxu0 0
    %809 = vmatprep.subr.bf16.mxu0 0
    %810 = vmatpush1.bf16.msra.mxu0 0
    %811 = vmatprep.subr.bf16.mxu0 0
    %812 = vmatpush1.bf16.msra.mxu0 0
    %813 = vmatprep.mubr.bf16.mxu0 0
    %814 = vmatmul.mubr.bf16.gmra.mrb[0].mxu0 %v780
    %v815 = vpop.f32.mrb[0].mxu0
    %v816 = vadd.f32 0.0, %v815
    %v817 = vpop.f32.mrb[0].mxu0
    %v818 = vadd.f32 0.0, %v817
    %v819 = vpop.f32.mrb[0].mxu0
    %v820 = vpop.f32.mrb[0].mxu0
    %821 = vdwg.mxu0
    %822 = vmatprep.subr.bf16.mxu0 %v484
    %823 = vmatpush1.bf16.msra.mxu0 %v483
    %824 = vmatprep.subr.bf16.mxu0 %v488
    %825 = vmatpush1.bf16.msra.mxu0 %v487
    %826 = vmatprep.subr.bf16.mxu0 %v492
    %827 = vmatpush1.bf16.msra.mxu0 %v491
    %828 = vmatprep.subr.bf16.mxu0 %v496
    %829 = vmatpush1.bf16.msra.mxu0 %v495
    %830 = vmatprep.subr.bf16.mxu0 %v500
    %831 = vmatpush1.bf16.msra.mxu0 %v499
    %832 = vmatprep.subr.bf16.mxu0 %v504
    %833 = vmatpush1.bf16.msra.mxu0 %v503
    %834 = vmatprep.subr.bf16.mxu0 %v508
    %835 = vmatpush1.bf16.msra.mxu0 %v507
    %836 = vmatprep.subr.bf16.mxu0 %v512
    %837 = vmatpush1.bf16.msra.mxu0 %v511
    %838 = vmatprep.subr.bf16.mxu0 0
    %839 = vmatpush1.bf16.msra.mxu0 0
    %840 = vmatprep.subr.bf16.mxu0 0
    %841 = vmatpush1.bf16.msra.mxu0 0
    %842 = vmatprep.subr.bf16.mxu0 0
    %843 = vmatpush1.bf16.msra.mxu0 0
    %844 = vmatprep.subr.bf16.mxu0 0
    %845 = vmatpush1.bf16.msra.mxu0 0
    %846 = vmatprep.subr.bf16.mxu0 0
    %847 = vmatpush1.bf16.msra.mxu0 0
    %848 = vmatprep.subr.bf16.mxu0 0
    %849 = vmatpush1.bf16.msra.mxu0 0
    %850 = vmatprep.subr.bf16.mxu0 0
    %851 = vmatpush1.bf16.msra.mxu0 0
    %852 = vmatprep.subr.bf16.mxu0 0
    %853 = vmatpush1.bf16.msra.mxu0 0
    %854 = vmatprep.mubr.bf16.mxu0 0
    %855 = vmatmul.mubr.bf16.gmra.mrb[0].mxu0 %v780
    %v856 = vpop.f32.mrb[0].mxu0
    %v857 = vadd.f32 0.0, %v856
    %v858 = vpop.f32.mrb[0].mxu0
    %v859 = vadd.f32 0.0, %v858
    %v860 = vpop.f32.mrb[0].mxu0
    %v861 = vpop.f32.mrb[0].mxu0
    %862 = vdwg.mxu0
    %v863 = vadd.f32 %v776, %v816
    %v864 = vadd.f32 %v777, %v818
    %v865 = vadd.f32 %v778, %v857
    %v866 = vadd.f32 %v779, %v859
    %v867 = vxor.u32 %v863, 2147483648
    %v868 = vxor.u32 %v864, 2147483648
    %v869 = vxor.u32 %v865, 2147483648
    %v870 = vmul.f32 %v867, 1.442695
    %v871 = vpow.pop %v870
    %v872 = vmul.f32 %v868, 1.442695
    %v873 = vpow.pop %v872
    %v874 = vmul.f32 %v869, 1.442695
    %v875 = vpow.pop %v874
    %v876 = vadd.f32 %v871, 1.0
    %v877 = vadd.f32 %v873, 1.0
    %v878 = vadd.f32 %v875, 1.0
    %v879 = vrcp.pop %v876
    %v880 = vmul.f32 1.0, %v879
    %v881 = vrcp.pop %v877
    %v882 = vmul.f32 1.0, %v881
    %v883 = vrcp.pop %v878
    %v884 = vmul.f32 1.0, %v883
    %v885 = vtanh.pop %v866
    %v886 = vmul.f32 %v882, %v770
    %v887 = vmul.f32 %v880, %v885
    %v888 = vadd.f32 %v886, %v887
    %v889 = vtanh.pop %v888
    %v890 = vmul.f32 %v884, %v889
    %s891 = smul.u32 3, 4
    %s892 = smul.addr %s891, 8
    %s893 = scalar_lea.vmem [#allocation2], %s892
    %v894 = vld [vmem:[%s893] sm:$0xff]
    %v895 = vld [vmem:[%s893 + $0x8] sm:$0xff]
    %v896 = vld [vmem:[%s893 + $0x10] sm:$0xff]
    %v897 = vld [vmem:[%s893 + $0x18] sm:$0xff]
    %v898 = vpack.c.bf16 %v890, %v890
    %899 = vmatprep.subr.bf16.mxu0 %v482
    %900 = vmatpush1.bf16.msra.mxu0 %v481
    %901 = vmatprep.subr.bf16.mxu0 %v486
    %902 = vmatpush1.bf16.msra.mxu0 %v485
    %903 = vmatprep.subr.bf16.mxu0 %v490
    %904 = vmatpush1.bf16.msra.mxu0 %v489
    %905 = vmatprep.subr.bf16.mxu0 %v494
    %906 = vmatpush1.bf16.msra.mxu0 %v493
    %907 = vmatprep.subr.bf16.mxu0 %v498
    %908 = vmatpush1.bf16.msra.mxu0 %v497
    %909 = vmatprep.subr.bf16.mxu0 %v502
    %910 = vmatpush1.bf16.msra.mxu0 %v501
    %911 = vmatprep.subr.bf16.mxu0 %v506
    %912 = vmatpush1.bf16.msra.mxu0 %v505
    %913 = vmatprep.subr.bf16.mxu0 %v510
    %914 = vmatpush1.bf16.msra.mxu0 %v509
    %915 = vmatprep.subr.bf16.mxu0 0
    %916 = vmatpush1.bf16.msra.mxu0 0
    %917 = vmatprep.subr.bf16.mxu0 0
    %918 = vmatpush1.bf16.msra.mxu0 0
    %919 = vmatprep.subr.bf16.mxu0 0
    %920 = vmatpush1.bf16.msra.mxu0 0
    %921 = vmatprep.subr.bf16.mxu0 0
    %922 = vmatpush1.bf16.msra.mxu0 0
    %923 = vmatprep.subr.bf16.mxu0 0
    %924 = vmatpush1.bf16.msra.mxu0 0
    %925 = vmatprep.subr.bf16.mxu0 0
    %926 = vmatpush1.bf16.msra.mxu0 0
    %927 = vmatprep.subr.bf16.mxu0 0
    %928 = vmatpush1.bf16.msra.mxu0 0
    %929 = vmatprep.subr.bf16.mxu0 0
    %930 = vmatpush1.bf16.msra.mxu0 0
    %931 = vmatprep.mubr.bf16.mxu0 0
    %932 = vmatmul.mubr.bf16.gmra.mrb[0].mxu0 %v898
    %v933 = vpop.f32.mrb[0].mxu0
    %v934 = vadd.f32 0.0, %v933
    %v935 = vpop.f32.mrb[0].mxu0
    %v936 = vadd.f32 0.0, %v935
    %v937 = vpop.f32.mrb[0].mxu0
    %v938 = vpop.f32.mrb[0].mxu0
    %939 = vdwg.mxu0
    %940 = vmatprep.subr.bf16.mxu0 %v484
    %941 = vmatpush1.bf16.msra.mxu0 %v483
    %942 = vmatprep.subr.bf16.mxu0 %v488
    %943 = vmatpush1.bf16.msra.mxu0 %v487
    %944 = vmatprep.subr.bf16.mxu0 %v492
    %945 = vmatpush1.bf16.msra.mxu0 %v491
    %946 = vmatprep.subr.bf16.mxu0 %v496
    %947 = vmatpush1.bf16.msra.mxu0 %v495
    %948 = vmatprep.subr.bf16.mxu0 %v500
    %949 = vmatpush1.bf16.msra.mxu0 %v499
    %950 = vmatprep.subr.bf16.mxu0 %v504
    %951 = vmatpush1.bf16.msra.mxu0 %v503
    %952 = vmatprep.subr.bf16.mxu0 %v508
    %953 = vmatpush1.bf16.msra.mxu0 %v507
    %954 = vmatprep.subr.bf16.mxu0 %v512
    %955 = vmatpush1.bf16.msra.mxu0 %v511
    %956 = vmatprep.subr.bf16.mxu0 0
    %957 = vmatpush1.bf16.msra.mxu0 0
    %958 = vmatprep.subr.bf16.mxu0 0
    %959 = vmatpush1.bf16.msra.mxu0 0
    %960 = vmatprep.subr.bf16.mxu0 0
    %961 = vmatpush1.bf16.msra.mxu0 0
    %962 = vmatprep.subr.bf16.mxu0 0
    %963 = vmatpush1.bf16.msra.mxu0 0
    %964 = vmatprep.subr.bf16.mxu0 0
    %965 = vmatpush1.bf16.msra.mxu0 0
    %966 = vmatprep.subr.bf16.mxu0 0
    %967 = vmatpush1.bf16.msra.mxu0 0
    %968 = vmatprep.subr.bf16.mxu0 0
    %969 = vmatpush1.bf16.msra.mxu0 0
    %970 = vmatprep.subr.bf16.mxu0 0
    %971 = vmatpush1.bf16.msra.mxu0 0
    %972 = vmatprep.mubr.bf16.mxu0 0
    %973 = vmatmul.mubr.bf16.gmra.mrb[0].mxu0 %v898
    %v974 = vpop.f32.mrb[0].mxu0
    %v975 = vadd.f32 0.0, %v974
    %v976 = vpop.f32.mrb[0].mxu0
    %v977 = vadd.f32 0.0, %v976
    %v978 = vpop.f32.mrb[0].mxu0
    %v979 = vpop.f32.mrb[0].mxu0
    %980 = vdwg.mxu0
    %v981 = vadd.f32 %v894, %v934
    %v982 = vadd.f32 %v895, %v936
    %v983 = vadd.f32 %v896, %v975
    %v984 = vadd.f32 %v897, %v977
    %v985 = vxor.u32 %v981, 2147483648
    %v986 = vxor.u32 %v982, 2147483648
    %v987 = vxor.u32 %v983, 2147483648
    %v988 = vmul.f32 %v985, 1.442695
    %v989 = vpow.pop %v988
    %v990 = vmul.f32 %v986, 1.442695
    %v991 = vpow.pop %v990
    %v992 = vmul.f32 %v987, 1.442695
    %v993 = vpow.pop %v992
    %v994 = vadd.f32 %v989, 1.0
    %v995 = vadd.f32 %v991, 1.0
    %v996 = vadd.f32 %v993, 1.0
    %v997 = vrcp.pop %v994
    %v998 = vmul.f32 1.0, %v997
    %v999 = vrcp.pop %v995
    %v1000 = vmul.f32 1.0, %v999
    %v1001 = vrcp.pop %v996
    %v1002 = vmul.f32 1.0, %v1001
    %v1003 = vtanh.pop %v984
    %v1004 = vmul.f32 %v1000, %v888
    %v1005 = vmul.f32 %v998, %v1003
    %v1006 = vadd.f32 %v1004, %v1005
    %v1007 = vtanh.pop %v1006
    %v1008 = vmul.f32 %v1002, %v1007
    %s1009 = smul.u32 4, 4
    %s1010 = smul.addr %s1009, 8
    %s1011 = scalar_lea.vmem [#allocation2], %s1010
    %v1012 = vld [vmem:[%s1011] sm:$0xff]
    %v1013 = vld [vmem:[%s1011 + $0x8] sm:$0xff]
    %v1014 = vld [vmem:[%s1011 + $0x10] sm:$0xff]
    %v1015 = vld [vmem:[%s1011 + $0x18] sm:$0xff]
    %v1016 = vpack.c.bf16 %v1008, %v1008
    %1017 = vmatprep.subr.bf16.mxu0 %v482
    %1018 = vmatpush1.bf16.msra.mxu0 %v481
    %1019 = vmatprep.subr.bf16.mxu0 %v486
    %1020 = vmatpush1.bf16.msra.mxu0 %v485
    %1021 = vmatprep.subr.bf16.mxu0 %v490
    %1022 = vmatpush1.bf16.msra.mxu0 %v489
    %1023 = vmatprep.subr.bf16.mxu0 %v494
    %1024 = vmatpush1.bf16.msra.mxu0 %v493
    %1025 = vmatprep.subr.bf16.mxu0 %v498
    %1026 = vmatpush1.bf16.msra.mxu0 %v497
    %1027 = vmatprep.subr.bf16.mxu0 %v502
    %1028 = vmatpush1.bf16.msra.mxu0 %v501
    %1029 = vmatprep.subr.bf16.mxu0 %v506
    %1030 = vmatpush1.bf16.msra.mxu0 %v505
    %1031 = vmatprep.subr.bf16.mxu0 %v510
    %1032 = vmatpush1.bf16.msra.mxu0 %v509
    %1033 = vmatprep.subr.bf16.mxu0 0
    %1034 = vmatpush1.bf16.msra.mxu0 0
    %1035 = vmatprep.subr.bf16.mxu0 0
    %1036 = vmatpush1.bf16.msra.mxu0 0
    %1037 = vmatprep.subr.bf16.mxu0 0
    %1038 = vmatpush1.bf16.msra.mxu0 0
    %1039 = vmatprep.subr.bf16.mxu0 0
    %1040 = vmatpush1.bf16.msra.mxu0 0
    %1041 = vmatprep.subr.bf16.mxu0 0
    %1042 = vmatpush1.bf16.msra.mxu0 0
    %1043 = vmatprep.subr.bf16.mxu0 0
    %1044 = vmatpush1.bf16.msra.mxu0 0
    %1045 = vmatprep.subr.bf16.mxu0 0
    %1046 = vmatpush1.bf16.msra.mxu0 0
    %1047 = vmatprep.subr.bf16.mxu0 0
    %1048 = vmatpush1.bf16.msra.mxu0 0
    %1049 = vmatprep.mubr.bf16.mxu0 0
    %1050 = vmatmul.mubr.bf16.gmra.mrb[0].mxu0 %v1016
    %v1051 = vpop.f32.mrb[0].mxu0
    %v1052 = vadd.f32 0.0, %v1051
    %v1053 = vpop.f32.mrb[0].mxu0
    %v1054 = vadd.f32 0.0, %v1053
    %v1055 = vpop.f32.mrb[0].mxu0
    %v1056 = vpop.f32.mrb[0].mxu0
    %1057 = vdwg.mxu0
    %1058 = vmatprep.subr.bf16.mxu0 %v484
    %1059 = vmatpush1.bf16.msra.mxu0 %v483
    %1060 = vmatprep.subr.bf16.mxu0 %v488
    %1061 = vmatpush1.bf16.msra.mxu0 %v487
    %1062 = vmatprep.subr.bf16.mxu0 %v492
    %1063 = vmatpush1.bf16.msra.mxu0 %v491
    %1064 = vmatprep.subr.bf16.mxu0 %v496
    %1065 = vmatpush1.bf16.msra.mxu0 %v495
    %1066 = vmatprep.subr.bf16.mxu0 %v500
    %1067 = vmatpush1.bf16.msra.mxu0 %v499
    %1068 = vmatprep.subr.bf16.mxu0 %v504
    %1069 = vmatpush1.bf16.msra.mxu0 %v503
    %1070 = vmatprep.subr.bf16.mxu0 %v508
    %1071 = vmatpush1.bf16.msra.mxu0 %v507
    %1072 = vmatprep.subr.bf16.mxu0 %v512
    %1073 = vmatpush1.bf16.msra.mxu0 %v511
    %1074 = vmatprep.subr.bf16.mxu0 0
    %1075 = vmatpush1.bf16.msra.mxu0 0
    %1076 = vmatprep.subr.bf16.mxu0 0
    %1077 = vmatpush1.bf16.msra.mxu0 0
    %1078 = vmatprep.subr.bf16.mxu0 0
    %1079 = vmatpush1.bf16.msra.mxu0 0
    %1080 = vmatprep.subr.bf16.mxu0 0
    %1081 = vmatpush1.bf16.msra.mxu0 0
    %1082 = vmatprep.subr.bf16.mxu0 0
    %1083 = vmatpush1.bf16.msra.mxu0 0
    %1084 = vmatprep.subr.bf16.mxu0 0
    %1085 = vmatpush1.bf16.msra.mxu0 0
    %1086 = vmatprep.subr.bf16.mxu0 0
    %1087 = vmatpush1.bf16.msra.mxu0 0
    %1088 = vmatprep.subr.bf16.mxu0 0
    %1089 = vmatpush1.bf16.msra.mxu0 0
    %1090 = vmatprep.mubr.bf16.mxu0 0
    %1091 = vmatmul.mubr.bf16.gmra.mrb[0].mxu0 %v1016
    %v1092 = vpop.f32.mrb[0].mxu0
    %v1093 = vadd.f32 0.0, %v1092
    %v1094 = vpop.f32.mrb[0].mxu0
    %v1095 = vadd.f32 0.0, %v1094
    %v1096 = vpop.f32.mrb[0].mxu0
    %v1097 = vpop.f32.mrb[0].mxu0
    %1098 = vdwg.mxu0
    %v1099 = vadd.f32 %v1012, %v1052
    %v1100 = vadd.f32 %v1013, %v1054
    %v1101 = vadd.f32 %v1014, %v1093
    %v1102 = vadd.f32 %v1015, %v1095
    %v1103 = vxor.u32 %v1099, 2147483648
    %v1104 = vxor.u32 %v1100, 2147483648
    %v1105 = vxor.u32 %v1101, 2147483648
    %v1106 = vmul.f32 %v1103, 1.442695
    %v1107 = vpow.pop %v1106
    %v1108 = vmul.f32 %v1104, 1.442695
    %v1109 = vpow.pop %v1108
    %v1110 = vmul.f32 %v1105, 1.442695
    %v1111 = vpow.pop %v1110
    %v1112 = vadd.f32 %v1107, 1.0
    %v1113 = vadd.f32 %v1109, 1.0
    %v1114 = vadd.f32 %v1111, 1.0
    %v1115 = vrcp.pop %v1112
    %v1116 = vmul.f32 1.0, %v1115
    %v1117 = vrcp.pop %v1113
    %v1118 = vmul.f32 1.0, %v1117
    %v1119 = vrcp.pop %v1114
    %v1120 = vmul.f32 1.0, %v1119
    %v1121 = vtanh.pop %v1102
    %v1122 = vmul.f32 %v1118, %v1006
    %v1123 = vmul.f32 %v1116, %v1121
    %v1124 = vadd.f32 %v1122, %v1123
    %v1125 = vtanh.pop %v1124
    %v1126 = vmul.f32 %v1120, %v1125
    %s1127 = smul.u32 5, 4
    %s1128 = smul.addr %s1127, 8
    %s1129 = scalar_lea.vmem [#allocation2], %s1128
    %v1130 = vld [vmem:[%s1129] sm:$0xff]
    %v1131 = vld [vmem:[%s1129 + $0x8] sm:$0xff]
    %v1132 = vld [vmem:[%s1129 + $0x10] sm:$0xff]
    %v1133 = vld [vmem:[%s1129 + $0x18] sm:$0xff]
    %v1134 = vpack.c.bf16 %v1126, %v1126
    %1135 = vmatprep.subr.bf16.mxu0 %v482
    %1136 = vmatpush1.bf16.msra.mxu0 %v481
    %1137 = vmatprep.subr.bf16.mxu0 %v486
    %1138 = vmatpush1.bf16.msra.mxu0 %v485
    %1139 = vmatprep.subr.bf16.mxu0 %v490
    %1140 = vmatpush1.bf16.msra.mxu0 %v489
    %1141 = vmatprep.subr.bf16.mxu0 %v494
    %1142 = vmatpush1.bf16.msra.mxu0 %v493
    %1143 = vmatprep.subr.bf16.mxu0 %v498
    %1144 = vmatpush1.bf16.msra.mxu0 %v497
    %1145 = vmatprep.subr.bf16.mxu0 %v502
    %1146 = vmatpush1.bf16.msra.mxu0 %v501
    %1147 = vmatprep.subr.bf16.mxu0 %v506
    %1148 = vmatpush1.bf16.msra.mxu0 %v505
    %1149 = vmatprep.subr.bf16.mxu0 %v510
    %1150 = vmatpush1.bf16.msra.mxu0 %v509
    %1151 = vmatprep.subr.bf16.mxu0 0
    %1152 = vmatpush1.bf16.msra.mxu0 0
    %1153 = vmatprep.subr.bf16.mxu0 0
    %1154 = vmatpush1.bf16.msra.mxu0 0
    %1155 = vmatprep.subr.bf16.mxu0 0
    %1156 = vmatpush1.bf16.msra.mxu0 0
    %1157 = vmatprep.subr.bf16.mxu0 0
    %1158 = vmatpush1.bf16.msra.mxu0 0
    %1159 = vmatprep.subr.bf16.mxu0 0
    %1160 = vmatpush1.bf16.msra.mxu0 0
    %1161 = vmatprep.subr.bf16.mxu0 0
    %1162 = vmatpush1.bf16.msra.mxu0 0
    %1163 = vmatprep.subr.bf16.mxu0 0
    %1164 = vmatpush1.bf16.msra.mxu0 0
    %1165 = vmatprep.subr.bf16.mxu0 0
    %1166 = vmatpush1.bf16.msra.mxu0 0
    %1167 = vmatprep.mubr.bf16.mxu0 0
    %1168 = vmatmul.mubr.bf16.gmra.mrb[0].mxu0 %v1134
    %v1169 = vpop.f32.mrb[0].mxu0
    %v1170 = vadd.f32 0.0, %v1169
    %v1171 = vpop.f32.mrb[0].mxu0
    %v1172 = vadd.f32 0.0, %v1171
    %v1173 = vpop.f32.mrb[0].mxu0
    %v1174 = vpop.f32.mrb[0].mxu0
    %1175 = vdwg.mxu0
    %1176 = vmatprep.subr.bf16.mxu0 %v484
    %1177 = vmatpush1.bf16.msra.mxu0 %v483
    %1178 = vmatprep.subr.bf16.mxu0 %v488
    %1179 = vmatpush1.bf16.msra.mxu0 %v487
    %1180 = vmatprep.subr.bf16.mxu0 %v492
    %1181 = vmatpush1.bf16.msra.mxu0 %v491
    %1182 = vmatprep.subr.bf16.mxu0 %v496
    %1183 = vmatpush1.bf16.msra.mxu0 %v495
    %1184 = vmatprep.subr.bf16.mxu0 %v500
    %1185 = vmatpush1.bf16.msra.mxu0 %v499
    %1186 = vmatprep.subr.bf16.mxu0 %v504
    %1187 = vmatpush1.bf16.msra.mxu0 %v503
    %1188 = vmatprep.subr.bf16.mxu0 %v508
    %1189 = vmatpush1.bf16.msra.mxu0 %v507
    %1190 = vmatprep.subr.bf16.mxu0 %v512
    %1191 = vmatpush1.bf16.msra.mxu0 %v511
    %1192 = vmatprep.subr.bf16.mxu0 0
    %1193 = vmatpush1.bf16.msra.mxu0 0
    %1194 = vmatprep.subr.bf16.mxu0 0
    %1195 = vmatpush1.bf16.msra.mxu0 0
    %1196 = vmatprep.subr.bf16.mxu0 0
    %1197 = vmatpush1.bf16.msra.mxu0 0
    %1198 = vmatprep.subr.bf16.mxu0 0
    %1199 = vmatpush1.bf16.msra.mxu0 0
    %1200 = vmatprep.subr.bf16.mxu0 0
    %1201 = vmatpush1.bf16.msra.mxu0 0
    %1202 = vmatprep.subr.bf16.mxu0 0
    %1203 = vmatpush1.bf16.msra.mxu0 0
    %1204 = vmatprep.subr.bf16.mxu0 0
    %1205 = vmatpush1.bf16.msra.mxu0 0
    %1206 = vmatprep.subr.bf16.mxu0 0
    %1207 = vmatpush1.bf16.msra.mxu0 0
    %1208 = vmatprep.mubr.bf16.mxu0 0
    %1209 = vmatmul.mubr.bf16.gmra.mrb[0].mxu0 %v1134
    %v1210 = vpop.f32.mrb[0].mxu0
    %v1211 = vadd.f32 0.0, %v1210
    %v1212 = vpop.f32.mrb[0].mxu0
    %v1213 = vadd.f32 0.0, %v1212
    %v1214 = vpop.f32.mrb[0].mxu0
    %v1215 = vpop.f32.mrb[0].mxu0
    %1216 = vdwg.mxu0
    %v1217 = vadd.f32 %v1130, %v1170
    %v1218 = vadd.f32 %v1131, %v1172
    %v1219 = vadd.f32 %v1132, %v1211
    %v1220 = vadd.f32 %v1133, %v1213
    %v1221 = vxor.u32 %v1217, 2147483648
    %v1222 = vxor.u32 %v1218, 2147483648
    %v1223 = vxor.u32 %v1219, 2147483648
    %v1224 = vmul.f32 %v1221, 1.442695
    %v1225 = vpow.pop %v1224
    %v1226 = vmul.f32 %v1222, 1.442695
    %v1227 = vpow.pop %v1226
    %v1228 = vmul.f32 %v1223, 1.442695
    %v1229 = vpow.pop %v1228
    %v1230 = vadd.f32 %v1225, 1.0
    %v1231 = vadd.f32 %v1227, 1.0
    %v1232 = vadd.f32 %v1229, 1.0
    %v1233 = vrcp.pop %v1230
    %v1234 = vmul.f32 1.0, %v1233
    %v1235 = vrcp.pop %v1231
    %v1236 = vmul.f32 1.0, %v1235
    %v1237 = vrcp.pop %v1232
    %v1238 = vmul.f32 1.0, %v1237
    %v1239 = vtanh.pop %v1220
    %v1240 = vmul.f32 %v1236, %v1124
    %v1241 = vmul.f32 %v1234, %v1239
    %v1242 = vadd.f32 %v1240, %v1241
    %v1243 = vtanh.pop %v1242
    %v1244 = vmul.f32 %v1238, %v1243
    %s1245 = smul.u32 6, 4
    %s1246 = smul.addr %s1245, 8
    %s1247 = scalar_lea.vmem [#allocation2], %s1246
    %v1248 = vld [vmem:[%s1247] sm:$0xff]
    %v1249 = vld [vmem:[%s1247 + $0x8] sm:$0xff]
    %v1250 = vld [vmem:[%s1247 + $0x10] sm:$0xff]
    %v1251 = vld [vmem:[%s1247 + $0x18] sm:$0xff]
    %v1252 = vpack.c.bf16 %v1244, %v1244
    %1253 = vmatprep.subr.bf16.mxu0 %v482
    %1254 = vmatpush1.bf16.msra.mxu0 %v481
    %1255 = vmatprep.subr.bf16.mxu0 %v486
    %1256 = vmatpush1.bf16.msra.mxu0 %v485
    %1257 = vmatprep.subr.bf16.mxu0 %v490
    %1258 = vmatpush1.bf16.msra.mxu0 %v489
    %1259 = vmatprep.subr.bf16.mxu0 %v494
    %1260 = vmatpush1.bf16.msra.mxu0 %v493
    %1261 = vmatprep.subr.bf16.mxu0 %v498
    %1262 = vmatpush1.bf16.msra.mxu0 %v497
    %1263 = vmatprep.subr.bf16.mxu0 %v502
    %1264 = vmatpush1.bf16.msra.mxu0 %v501
    %1265 = vmatprep.subr.bf16.mxu0 %v506
    %1266 = vmatpush1.bf16.msra.mxu0 %v505
    %1267 = vmatprep.subr.bf16.mxu0 %v510
    %1268 = vmatpush1.bf16.msra.mxu0 %v509
    %1269 = vmatprep.subr.bf16.mxu0 0
    %1270 = vmatpush1.bf16.msra.mxu0 0
    %1271 = vmatprep.subr.bf16.mxu0 0
    %1272 = vmatpush1.bf16.msra.mxu0 0
    %1273 = vmatprep.subr.bf16.mxu0 0
    %1274 = vmatpush1.bf16.msra.mxu0 0
    %1275 = vmatprep.subr.bf16.mxu0 0
    %1276 = vmatpush1.bf16.msra.mxu0 0
    %1277 = vmatprep.subr.bf16.mxu0 0
    %1278 = vmatpush1.bf16.msra.mxu0 0
    %1279 = vmatprep.subr.bf16.mxu0 0
    %1280 = vmatpush1.bf16.msra.mxu0 0
    %1281 = vmatprep.subr.bf16.mxu0 0
    %1282 = vmatpush1.bf16.msra.mxu0 0
    %1283 = vmatprep.subr.bf16.mxu0 0
    %1284 = vmatpush1.bf16.msra.mxu0 0
    %1285 = vmatprep.mubr.bf16.mxu0 0
    %1286 = vmatmul.mubr.bf16.gmra.mrb[0].mxu0 %v1252
    %v1287 = vpop.f32.mrb[0].mxu0
    %v1288 = vadd.f32 0.0, %v1287
    %v1289 = vpop.f32.mrb[0].mxu0
    %v1290 = vadd.f32 0.0, %v1289
    %v1291 = vpop.f32.mrb[0].mxu0
    %v1292 = vpop.f32.mrb[0].mxu0
    %1293 = vdwg.mxu0
    %1294 = vmatprep.subr.bf16.mxu0 %v484
    %1295 = vmatpush1.bf16.msra.mxu0 %v483
    %1296 = vmatprep.subr.bf16.mxu0 %v488
    %1297 = vmatpush1.bf16.msra.mxu0 %v487
    %1298 = vmatprep.subr.bf16.mxu0 %v492
    %1299 = vmatpush1.bf16.msra.mxu0 %v491
    %1300 = vmatprep.subr.bf16.mxu0 %v496
    %1301 = vmatpush1.bf16.msra.mxu0 %v495
    %1302 = vmatprep.subr.bf16.mxu0 %v500
    %1303 = vmatpush1.bf16.msra.mxu0 %v499
    %1304 = vmatprep.subr.bf16.mxu0 %v504
    %1305 = vmatpush1.bf16.msra.mxu0 %v503
    %1306 = vmatprep.subr.bf16.mxu0 %v508
    %1307 = vmatpush1.bf16.msra.mxu0 %v507
    %1308 = vmatprep.subr.bf16.mxu0 %v512
    %1309 = vmatpush1.bf16.msra.mxu0 %v511
    %1310 = vmatprep.subr.bf16.mxu0 0
    %1311 = vmatpush1.bf16.msra.mxu0 0
    %1312 = vmatprep.subr.bf16.mxu0 0
    %1313 = vmatpush1.bf16.msra.mxu0 0
    %1314 = vmatprep.subr.bf16.mxu0 0
    %1315 = vmatpush1.bf16.msra.mxu0 0
    %1316 = vmatprep.subr.bf16.mxu0 0
    %1317 = vmatpush1.bf16.msra.mxu0 0
    %1318 = vmatprep.subr.bf16.mxu0 0
    %1319 = vmatpush1.bf16.msra.mxu0 0
    %1320 = vmatprep.subr.bf16.mxu0 0
    %1321 = vmatpush1.bf16.msra.mxu0 0
    %1322 = vmatprep.subr.bf16.mxu0 0
    %1323 = vmatpush1.bf16.msra.mxu0 0
    %1324 = vmatprep.subr.bf16.mxu0 0
    %1325 = vmatpush1.bf16.msra.mxu0 0
    %1326 = vmatprep.mubr.bf16.mxu0 0
    %1327 = vmatmul.mubr.bf16.gmra.mrb[0].mxu0 %v1252
    %v1328 = vpop.f32.mrb[0].mxu0
    %v1329 = vadd.f32 0.0, %v1328
    %v1330 = vpop.f32.mrb[0].mxu0
    %v1331 = vadd.f32 0.0, %v1330
    %v1332 = vpop.f32.mrb[0].mxu0
    %v1333 = vpop.f32.mrb[0].mxu0
    %1334 = vdwg.mxu0
    %v1335 = vadd.f32 %v1248, %v1288
    %v1336 = vadd.f32 %v1249, %v1290
    %v1337 = vadd.f32 %v1250, %v1329
    %v1338 = vadd.f32 %v1251, %v1331
    %v1339 = vxor.u32 %v1335, 2147483648
    %v1340 = vxor.u32 %v1336, 2147483648
    %v1341 = vxor.u32 %v1337, 2147483648
    %v1342 = vmul.f32 %v1339, 1.442695
    %v1343 = vpow.pop %v1342
    %v1344 = vmul.f32 %v1340, 1.442695
    %v1345 = vpow.pop %v1344
    %v1346 = vmul.f32 %v1341, 1.442695
    %v1347 = vpow.pop %v1346
    %v1348 = vadd.f32 %v1343, 1.0
    %v1349 = vadd.f32 %v1345, 1.0
    %v1350 = vadd.f32 %v1347, 1.0
    %v1351 = vrcp.pop %v1348
    %v1352 = vmul.f32 1.0, %v1351
    %v1353 = vrcp.pop %v1349
    %v1354 = vmul.f32 1.0, %v1353
    %v1355 = vrcp.pop %v1350
    %v1356 = vmul.f32 1.0, %v1355
    %v1357 = vtanh.pop %v1338
    %v1358 = vmul.f32 %v1354, %v1242
    %v1359 = vmul.f32 %v1352, %v1357
    %v1360 = vadd.f32 %v1358, %v1359
    %v1361 = vtanh.pop %v1360
    %v1362 = vmul.f32 %v1356, %v1361
    %s1363 = smul.u32 7, 4
    %s1364 = smul.addr %s1363, 8
    %s1365 = scalar_lea.vmem [#allocation2], %s1364
    %v1366 = vld [vmem:[%s1365] sm:$0xff]
    %v1367 = vld [vmem:[%s1365 + $0x8] sm:$0xff]
    %v1368 = vld [vmem:[%s1365 + $0x10] sm:$0xff]
    %v1369 = vld [vmem:[%s1365 + $0x18] sm:$0xff]
    %v1370 = vpack.c.bf16 %v1362, %v1362
    %1371 = vmatprep.subr.bf16.mxu0 %v482
    %1372 = vmatpush1.bf16.msra.mxu0 %v481
    %1373 = vmatprep.subr.bf16.mxu0 %v486
    %1374 = vmatpush1.bf16.msra.mxu0 %v485
    %1375 = vmatprep.subr.bf16.mxu0 %v490
    %1376 = vmatpush1.bf16.msra.mxu0 %v489
    %1377 = vmatprep.subr.bf16.mxu0 %v494
    %1378 = vmatpush1.bf16.msra.mxu0 %v493
    %1379 = vmatprep.subr.bf16.mxu0 %v498
    %1380 = vmatpush1.bf16.msra.mxu0 %v497
    %1381 = vmatprep.subr.bf16.mxu0 %v502
    %1382 = vmatpush1.bf16.msra.mxu0 %v501
    %1383 = vmatprep.subr.bf16.mxu0 %v506
    %1384 = vmatpush1.bf16.msra.mxu0 %v505
    %1385 = vmatprep.subr.bf16.mxu0 %v510
    %1386 = vmatpush1.bf16.msra.mxu0 %v509
    %1387 = vmatprep.subr.bf16.mxu0 0
    %1388 = vmatpush1.bf16.msra.mxu0 0
    %1389 = vmatprep.subr.bf16.mxu0 0
    %1390 = vmatpush1.bf16.msra.mxu0 0
    %1391 = vmatprep.subr.bf16.mxu0 0
    %1392 = vmatpush1.bf16.msra.mxu0 0
    %1393 = vmatprep.subr.bf16.mxu0 0
    %1394 = vmatpush1.bf16.msra.mxu0 0
    %1395 = vmatprep.subr.bf16.mxu0 0
    %1396 = vmatpush1.bf16.msra.mxu0 0
    %1397 = vmatprep.subr.bf16.mxu0 0
    %1398 = vmatpush1.bf16.msra.mxu0 0
    %1399 = vmatprep.subr.bf16.mxu0 0
    %1400 = vmatpush1.bf16.msra.mxu0 0
    %1401 = vmatprep.subr.bf16.mxu0 0
    %1402 = vmatpush1.bf16.msra.mxu0 0
    %1403 = vmatprep.mubr.bf16.mxu0 0
    %1404 = vmatmul.mubr.bf16.gmra.mrb[0].mxu0 %v1370
    %v1405 = vpop.f32.mrb[0].mxu0
    %v1406 = vadd.f32 0.0, %v1405
    %v1407 = vpop.f32.mrb[0].mxu0
    %v1408 = vadd.f32 0.0, %v1407
    %v1409 = vpop.f32.mrb[0].mxu0
    %v1410 = vpop.f32.mrb[0].mxu0
    %1411 = vdwg.mxu0
    %1412 = vmatprep.subr.bf16.mxu0 %v484
    %1413 = vmatpush1.bf16.msra.mxu0 %v483
    %1414 = vmatprep.subr.bf16.mxu0 %v488
    %1415 = vmatpush1.bf16.msra.mxu0 %v487
    %1416 = vmatprep.subr.bf16.mxu0 %v492
    %1417 = vmatpush1.bf16.msra.mxu0 %v491
    %1418 = vmatprep.subr.bf16.mxu0 %v496
    %1419 = vmatpush1.bf16.msra.mxu0 %v495
    %1420 = vmatprep.subr.bf16.mxu0 %v500
    %1421 = vmatpush1.bf16.msra.mxu0 %v499
    %1422 = vmatprep.subr.bf16.mxu0 %v504
    %1423 = vmatpush1.bf16.msra.mxu0 %v503
    %1424 = vmatprep.subr.bf16.mxu0 %v508
    %1425 = vmatpush1.bf16.msra.mxu0 %v507
    %1426 = vmatprep.subr.bf16.mxu0 %v512
    %1427 = vmatpush1.bf16.msra.mxu0 %v511
    %1428 = vmatprep.subr.bf16.mxu0 0
    %1429 = vmatpush1.bf16.msra.mxu0 0
    %1430 = vmatprep.subr.bf16.mxu0 0
    %1431 = vmatpush1.bf16.msra.mxu0 0
    %1432 = vmatprep.subr.bf16.mxu0 0
    %1433 = vmatpush1.bf16.msra.mxu0 0
    %1434 = vmatprep.subr.bf16.mxu0 0
    %1435 = vmatpush1.bf16.msra.mxu0 0
    %1436 = vmatprep.subr.bf16.mxu0 0
    %1437 = vmatpush1.bf16.msra.mxu0 0
    %1438 = vmatprep.subr.bf16.mxu0 0
    %1439 = vmatpush1.bf16.msra.mxu0 0
    %1440 = vmatprep.subr.bf16.mxu0 0
    %1441 = vmatpush1.bf16.msra.mxu0 0
    %1442 = vmatprep.subr.bf16.mxu0 0
    %1443 = vmatpush1.bf16.msra.mxu0 0
    %1444 = vmatprep.mubr.bf16.mxu0 0
    %1445 = vmatmul.mubr.bf16.gmra.mrb[0].mxu0 %v1370
    %v1446 = vpop.f32.mrb[0].mxu0
    %v1447 = vadd.f32 0.0, %v1446
    %v1448 = vpop.f32.mrb[0].mxu0
    %v1449 = vadd.f32 0.0, %v1448
    %v1450 = vpop.f32.mrb[0].mxu0
    %v1451 = vpop.f32.mrb[0].mxu0
    %1452 = vdwg.mxu0
    %v1453 = vadd.f32 %v1366, %v1406
    %v1454 = vadd.f32 %v1367, %v1408
    %v1455 = vadd.f32 %v1368, %v1447
    %v1456 = vadd.f32 %v1369, %v1449
    %v1457 = vxor.u32 %v1453, 2147483648
    %v1458 = vxor.u32 %v1454, 2147483648
    %v1459 = vxor.u32 %v1455, 2147483648
    %v1460 = vmul.f32 %v1457, 1.442695
    %v1461 = vpow.pop %v1460
    %v1462 = vmul.f32 %v1458, 1.442695
    %v1463 = vpow.pop %v1462
    %v1464 = vmul.f32 %v1459, 1.442695
    %v1465 = vpow.pop %v1464
    %v1466 = vadd.f32 %v1461, 1.0
    %v1467 = vadd.f32 %v1463, 1.0
    %v1468 = vadd.f32 %v1465, 1.0
    %v1469 = vrcp.pop %v1466
    %v1470 = vmul.f32 1.0, %v1469
    %v1471 = vrcp.pop %v1467
    %v1472 = vmul.f32 1.0, %v1471
    %v1473 = vrcp.pop %v1468
    %v1474 = vmul.f32 1.0, %v1473
    %v1475 = vtanh.pop %v1456
    %v1476 = vmul.f32 %v1472, %v1360
    %v1477 = vmul.f32 %v1470, %v1475
    %v1478 = vadd.f32 %v1476, %v1477
    %v1479 = vtanh.pop %v1478
    %v1480 = vmul.f32 %v1474, %v1479
    %1481 = vst [vmem:[#allocation3] sm:$0xff] %v1480
    %1482 = vst [vmem:[#allocation4] sm:$0xff] %v1478
    // Predicated region
    $region34: #{tpu_custom_call.1} parent=1 // pred_check
      %p1483 = pneg %p72
    $region35: #{tpu_custom_call.1} parent=1 // pred_check_branch
      %1485 = sbr.rel (%p1483) target = $region37
    $region36: #{tpu_custom_call.1} parent=1 // pred_region
      %v1486 = vld [vmem:[#allocation8] sm:$0xff]
      %v1487 = vld [vmem:[#allocation8 + $0x8] sm:$0xff]
      %v1488 = vld [vmem:[#allocation8 + $0x10] sm:$0xff]
      %v1489 = vld [vmem:[#allocation8 + $0x18] sm:$0xff]
      %v1490 = vld [vmem:[#allocation8 + $0x20] sm:$0xff]
      %v1491 = vld [vmem:[#allocation8 + $0x28] sm:$0xff]
      %v1492 = vld [vmem:[#allocation8 + $0x30] sm:$0xff]
      %v1493 = vld [vmem:[#allocation8 + $0x38] sm:$0xff]
      %v1494 = vld [vmem:[#allocation8 + $0x40] sm:$0xff]
      %v1495 = vld [vmem:[#allocation8 + $0x48] sm:$0xff]
      %v1496 = vld [vmem:[#allocation8 + $0x50] sm:$0xff]
      %v1497 = vld [vmem:[#allocation8 + $0x58] sm:$0xff]
      %v1498 = vld [vmem:[#allocation8 + $0x60] sm:$0xff]
      %v1499 = vld [vmem:[#allocation8 + $0x68] sm:$0xff]
      %v1500 = vld [vmem:[#allocation8 + $0x70] sm:$0xff]
      %v1501 = vld [vmem:[#allocation8 + $0x78] sm:$0xff]
      %1502 = vmatprep.subr.mxu0 0.0
      %1503 = vmatpush1.msra.mxu0 %v1486
      %1504 = vmatprep.subr.mxu0 0.0
      %1505 = vmatpush1.msra.mxu0 %v1487
      %1506 = vmatprep.subr.mxu0 0.0
      %1507 = vmatpush1.msra.mxu0 %v1488
      %1508 = vmatprep.subr.mxu0 0.0
      %1509 = vmatpush1.msra.mxu0 %v1489
      %1510 = vmatprep.subr.mxu0 0.0
      %1511 = vmatpush1.msra.mxu0 %v1490
      %1512 = vmatprep.subr.mxu0 0.0
      %1513 = vmatpush1.msra.mxu0 %v1491
      %1514 = vmatprep.subr.mxu0 0.0
      %1515 = vmatpush1.msra.mxu0 %v1492
      %1516 = vmatprep.subr.mxu0 0.0
      %1517 = vmatpush1.msra.mxu0 %v1493
      %1518 = vmatprep.subr.mxu0 0.0
      %1519 = vmatpush1.msra.mxu0 %v1494
      %1520 = vmatprep.subr.mxu0 0.0
      %1521 = vmatpush1.msra.mxu0 %v1495
      %1522 = vmatprep.subr.mxu0 0.0
      %1523 = vmatpush1.msra.mxu0 %v1496
      %1524 = vmatprep.subr.mxu0 0.0
      %1525 = vmatpush1.msra.mxu0 %v1497
      %1526 = vmatprep.subr.mxu0 0.0
      %1527 = vmatpush1.msra.mxu0 %v1498
      %1528 = vmatprep.subr.mxu0 0.0
      %1529 = vmatpush1.msra.mxu0 %v1499
      %1530 = vmatprep.subr.mxu0 0.0
      %1531 = vmatpush1.msra.mxu0 %v1500
      %1532 = vmatprep.subr.mxu0 0.0
      %1533 = vmatpush1.msra.mxu0 %v1501
      %1534 = vmatprep.subr.mxu0 0.0
      %1535 = vmatpush1.msra.mxu0 0.0
      %1536 = vmatprep.subr.mxu0 0.0
      %1537 = vmatpush1.msra.mxu0 0.0
      %1538 = vmatprep.subr.mxu0 0.0
      %1539 = vmatpush1.msra.mxu0 0.0
      %1540 = vmatprep.subr.mxu0 0.0
      %1541 = vmatpush1.msra.mxu0 0.0
      %1542 = vmatprep.subr.mxu0 0.0
      %1543 = vmatpush1.msra.mxu0 0.0
      %1544 = vmatprep.subr.mxu0 0.0
      %1545 = vmatpush1.msra.mxu0 0.0
      %1546 = vmatprep.subr.mxu0 0.0
      %1547 = vmatpush1.msra.mxu0 0.0
      %1548 = vmatprep.subr.mxu0 0.0
      %1549 = vmatpush1.msra.mxu0 0.0
      %1550 = vmatprep.subr.mxu0 0.0
      %1551 = vmatpush1.msra.mxu0 0.0
      %1552 = vmatprep.subr.mxu0 0.0
      %1553 = vmatpush1.msra.mxu0 0.0
      %1554 = vmatprep.subr.mxu0 0.0
      %1555 = vmatpush1.msra.mxu0 0.0
      %1556 = vmatprep.subr.mxu0 0.0
      %1557 = vmatpush1.msra.mxu0 0.0
      %1558 = vmatprep.subr.mxu0 0.0
      %1559 = vmatpush1.msra.mxu0 0.0
      %1560 = vmatprep.subr.mxu0 0.0
      %1561 = vmatpush1.msra.mxu0 0.0
      %1562 = vmatprep.subr.mxu0 0.0
      %1563 = vmatpush1.msra.mxu0 0.0
      %1564 = vmatprep.subr.mxu0 0.0
      %1565 = vmatpush1.msra.mxu0 0.0
      %1566 = vmatprep.mubr.f32.mxu0 0.0
      %1567 = vmatmul.mubr.f32.gmra.mrb[0].mxu0 %v1480
      %v1568 = vpop.f32.mrb[0].mxu0
      %v1569 = vadd.f32 0.0, %v1568
      %v1570 = vpop.f32.mrb[0].mxu0
      %1571 = vdwg.mxu0
      %1572 = vst [vmem:[#allocation10] sm:$0xff] %v1569
    $region37: #{tpu_custom_call.1} parent=1 // pred_fallthru
      _
    // Predicated region
    $region38: #{tpu_custom_call.1} parent=1 // pred_check
      _
    $region39: #{tpu_custom_call.1} parent=1 // pred_check_branch
      %1574 = sbr.rel (0) target = $region41
    $region40: #{tpu_custom_call.1} parent=1 // pred_region
      %s1576 = ssub.s32 128, 128
      %1577 = vsyncadd [#allocation7], %s1576
      %s1579 = sshll.u32 [#allocation10], 4
      %s1580 = int_to_ptr.vmem [resolvable:$true] %s1579
      %1582 = dma.vmem_to_hbm [thread:$0]  %s1580, 128, %s5, [#allocation7]
    $region41: #{tpu_custom_call.1} parent=1 // pred_fallthru
      _
    // Predicated region
    $region42: #{tpu_custom_call.1} parent=1 // pred_check
      _
    $region43: #{tpu_custom_call.1} parent=1 // pred_check_branch
      %1584 = sbr.rel (0) target = $region45
    $region44: #{tpu_custom_call.1} parent=1 // pred_region
      %1585 = dma.done [#allocation7], 128
    $region45: #{tpu_custom_call.1} parent=1 // pred_fallthru
      _
    %1586 = vsyncpa [#allocation6], 1
    %1587 = vsyncpa [#allocation9], 1
    %1588 = vsyncpa [#allocation7], 1

</llo_original>
